<compile_context>
chip_gen: v5e
topology: v5e:2x2
jax: 0.10.0
libtpu: 0.0.40
codegen_flags: <defaults>
</compile_context>

<pallas_src>
import math
import jax
import jax.numpy as jnp
from jax.experimental import pallas as pl
from jax.experimental.pallas import tpu as pltpu

B, S_TGT, S_SRC = 2, 8, 8
D_MODEL, N_HEADS, D_FF = 32, 4, 64
D_K = D_MODEL // N_HEADS
EPS = 1e-6
N_LAYERS = 2

# activation slab row layout: [ x (16) | enc (16) | tgt_add (8) | src_add (8) ]
_ROWS_X = B * S_TGT
_ROWS_ENC = B * S_SRC
_ROW_TGT_MASK = _ROWS_X + _ROWS_ENC
_ROW_SRC_MASK = _ROW_TGT_MASK + S_TGT
_ACT_ROWS = _ROW_SRC_MASK + S_TGT

# per-layer packed weight slab (all blocks zero-padded to a full 128-lane tile)
_W_LANES = 128
_R_WQKV1 = (0, 32)      # fused self-attn Q|K|V, Q columns pre-scaled by 1/sqrt(d_k)
_R_WO1 = (32, 64)
_R_WQ2 = (64, 96)       # cross-attn Q, pre-scaled
_R_WKV2 = (96, 128)     # fused cross-attn K|V
_R_WO2 = (128, 160)
_R_W1 = (160, 192)
_R_W2 = (192, 320)      # FFN second matmul, row-padded D_FF -> 128
_W_ROWS_TOTAL = 320

# per-layer vector slab rows: a1,g1,a2,g2,a3,g3,b1,b2 (each padded to 128 lanes)
_V_ROWS = 8


# ---------------- in-kernel math helpers -------------------------------------
def _layernorm(x, alpha, bias):
    # torch LayerNormalization: unbiased std (N-1), eps added to the std.
    mean = jnp.mean(x, axis=-1, keepdims=True)
    var = jnp.sum((x - mean) ** 2, axis=-1, keepdims=True) / (x.shape[-1] - 1)
    std = jnp.sqrt(var)
    return alpha * (x - mean) / (std + EPS) + bias


def _split_heads(mat, col0, seq):
    # Slice heads directly from a fused projection result (B*seq, 128):
    # head h of batch b lands at batch index h*B + b.
    m3 = mat.reshape(B, seq, mat.shape[-1])
    th = jnp.stack([m3[:, :, col0 + h * D_K: col0 + (h + 1) * D_K]
                    for h in range(N_HEADS)], axis=0)      # (H, B, seq, D_K)
    return th.reshape(N_HEADS * B, seq, D_K)


def _merge_heads(ctx, seq):
    # (H*B, seq, D_K) -> (B*seq, D_MODEL), heads concatenated on the lane dim.
    ctx4 = ctx.reshape(N_HEADS, B, seq, D_K)
    o = jnp.concatenate([ctx4[h] for h in range(N_HEADS)], axis=-1)
    return o.reshape(B * seq, D_MODEL)


def _attend(q_mat, q_off, kv_mat, k_off, v_off, mask_add, wo_full, s_q, s_kv):
    # q_mat/kv_mat are fused-projection outputs (rows, 128); offsets select
    # the Q / K / V column blocks.  Scale already folded into Q weights.
    qh = _split_heads(q_mat, q_off, s_q)
    kh = _split_heads(kv_mat, k_off, s_kv)
    vh = _split_heads(kv_mat, v_off, s_kv)
    s = jnp.einsum('nqd,nkd->nqk', qh, kh, preferred_element_type=jnp.float32)
    # additive mask: 0 keep / -1e9 drop.  NOTE: not bit-identical to the
    # reference's where(mask==0, -1e9, s) (masked logits become s-1e9), but
    # identical after softmax for bounded scores (well within 1e-4).
    s = s + mask_add[None, :, :]
    s = s - jnp.max(s, axis=-1, keepdims=True)
    p = jnp.exp(s)
    # exact divide (not approx reciprocal) to protect the 1e-4 tolerance.
    p = p / jnp.sum(p, axis=-1, keepdims=True)
    ctx = jnp.einsum('nqk,nkd->nqd', p, vh, preferred_element_type=jnp.float32)
    o = _merge_heads(ctx, s_q)
    return jnp.dot(o, wo_full, preferred_element_type=jnp.float32)[:, 0:D_MODEL]


# ---------------- Pallas kernel: one grid step == one decoder layer ----------
def decoder_layer_kernel(act_ref, wp_ref, vp_ref, out_ref):
    layer = pl.program_id(0)

    # Initialize the resident residual (output block, constant index_map) from
    # the input activations at the first layer.
    @pl.when(layer == 0)
    def _():
        out_ref[...] = act_ref[0:_ROWS_X, :]

    x = out_ref[...]                                        # (B*S_TGT, D)
    enc = act_ref[_ROWS_X:_ROWS_X + _ROWS_ENC, :]           # (B*S_SRC, D)
    tgt_add = act_ref[_ROW_TGT_MASK:_ROW_TGT_MASK + S_TGT, 0:S_TGT]
    src_add = act_ref[_ROW_SRC_MASK:_ROW_SRC_MASK + S_TGT, 0:S_SRC]

    a1 = vp_ref[0:1, 0:D_MODEL]; g1 = vp_ref[1:2, 0:D_MODEL]
    a2 = vp_ref[2:3, 0:D_MODEL]; g2 = vp_ref[3:4, 0:D_MODEL]
    a3 = vp_ref[4:5, 0:D_MODEL]; g3 = vp_ref[5:6, 0:D_MODEL]
    b1 = vp_ref[6:7, :]                                     # zero-padded to 128
    b2 = vp_ref[7:8, 0:D_MODEL]

    def w(rows):
        r0, r1 = rows
        return wp_ref[r0:r1, :]                             # whole-lane-tile load

    # TODO(synk): dropout layers are identity here (eval-mode semantics).

    # --- residual connection 0: x + self_attn(norm(x)) ------------------------
    xn = _layernorm(x, a1, g1)
    qkv = jnp.dot(xn, w(_R_WQKV1), preferred_element_type=jnp.float32)  # (16,128)
    x = x + _attend(qkv, 0, qkv, D_MODEL, 2 * D_MODEL, tgt_add,
                    w(_R_WO1), S_TGT, S_TGT)

    # --- residual connection 1: x + cross_attn(norm(x), enc) ------------------
    xn = _layernorm(x, a2, g2)
    q2 = jnp.dot(xn, w(_R_WQ2), preferred_element_type=jnp.float32)     # (16,128)
    kv2 = jnp.dot(enc, w(_R_WKV2), preferred_element_type=jnp.float32)  # (16,128)
    x = x + _attend(q2, 0, kv2, 0, D_MODEL, src_add,
                    w(_R_WO2), S_TGT, S_SRC)

    # --- residual connection 2: x + ffn(norm(x)) ------------------------------
    xn = _layernorm(x, a3, g3)
    h = jnp.maximum(jnp.dot(xn, w(_R_W1), preferred_element_type=jnp.float32) + b1,
                    0.0)                                    # (16,128), cols>=64 are 0
    x = x + jnp.dot(h, w(_R_W2), preferred_element_type=jnp.float32)[:, 0:D_MODEL] + b2

    out_ref[...] = x


# ---------------- one-time packing (hoisted out of the per-call path) --------
def pack_decoder_stack(layer_params, src_mask, tgt_mask):
    scale = 1.0 / math.sqrt(D_K)

    def pad_block(m, rows):
        return jnp.pad(m, ((0, rows - m.shape[0]), (0, _W_LANES - m.shape[1])))

    def pad_vec(v):
        return jnp.pad(v, (0, _W_LANES - v.shape[0]))

    wpacks, vpacks = [], []
    for p in layer_params:
        (wq1, wk1, wv1, wo1, wq2, wk2, wv2, wo2,
         w1, b1, w2, b2, a1, g1, a2, g2, a3, g3) = p
        wqkv1 = jnp.concatenate([wq1 * scale, wk1, wv1], axis=1)   # (D, 3D), Q pre-scaled
        wkv2 = jnp.concatenate([wk2, wv2], axis=1)                 # (D, 2D)
        wpacks.append(jnp.concatenate([
            pad_block(wqkv1, 32), pad_block(wo1, 32), pad_block(wq2 * scale, 32),
            pad_block(wkv2, 32), pad_block(wo2, 32), pad_block(w1, 32),
            pad_block(w2, 128)], axis=0))                          # (320, 128)
        vpacks.append(jnp.stack([pad_vec(a1), pad_vec(g1), pad_vec(a2), pad_vec(g2),
                                 pad_vec(a3), pad_vec(g3), pad_vec(b1), pad_vec(b2)],
                                axis=0))                           # (8, 128)
    wpack = jnp.stack(wpacks, axis=0)                              # (L, 320, 128)
    vpack = jnp.stack(vpacks, axis=0)                              # (L, 8, 128)

    # additive masks, packed into the (shared) activation slab rows.
    masks = jnp.zeros((2 * S_TGT, D_MODEL), jnp.float32)
    masks = masks.at[0:S_TGT, 0:S_TGT].set((tgt_mask - 1.0) * 1e9)
    masks = masks.at[S_TGT:2 * S_TGT, 0:S_SRC].set((src_mask - 1.0) * 1e9)
    return wpack, vpack, masks


# ---------------- wrapper ------------------------------------------------------
@jax.jit
def decoder_stack(x, enc, wpack, vpack, masks):
    n_layers = wpack.shape[0]
    act = jnp.concatenate([x.reshape(_ROWS_X, D_MODEL),
                           enc.reshape(_ROWS_ENC, D_MODEL),
                           masks], axis=0)                         # (48, 32)
    out = pl.pallas_call(
        decoder_layer_kernel,
        out_shape=jax.ShapeDtypeStruct((_ROWS_X, D_MODEL), jnp.float32),
        grid_spec=pltpu.PrefetchScalarGridSpec(
            num_scalar_prefetch=0,
            grid=(n_layers,),
            in_specs=[
                # activation slab: constant block index -> DMA'd once, resident
                pl.BlockSpec((_ACT_ROWS, D_MODEL), lambda l: (0, 0)),
                # per-layer weight slab
                pl.BlockSpec((None, _W_ROWS_TOTAL, _W_LANES), lambda l: (l, 0, 0)),
                # per-layer vector slab
                pl.BlockSpec((None, _V_ROWS, _W_LANES), lambda l: (l, 0, 0)),
            ],
            # constant block index across the layer axis -> residual stays
            # resident in VMEM for the whole stack, one HBM writeback at the end.
            out_specs=pl.BlockSpec((_ROWS_X, D_MODEL), lambda l: (0, 0)),
        ),
        compiler_params=pltpu.CompilerParams(
            dimension_semantics=("arbitrary",),
            vmem_limit_bytes=32 * 1024 * 1024),
    )(act, wpack, vpack)
    return out.reshape(B, S_TGT, D_MODEL)


# ---------------- pure-JAX reference (faithful to the torch math) ------------
def decoder_stack_ref(x, enc, src_mask, tgt_mask, layer_params):
    def ln(t, alpha, bias):
        mean = t.mean(axis=-1, keepdims=True)
        var = jnp.sum((t - mean) ** 2, axis=-1, keepdims=True) / (t.shape[-1] - 1)
        std = jnp.sqrt(var)
        return alpha * (t - mean) / (std + EPS) + bias

    def mha(q_in, k_in, v_in, mask, wq, wk, wv, wo):
        q = q_in @ wq; k = k_in @ wk; v = v_in @ wv
        heads = []
        for h in range(N_HEADS):
            lo = h * D_K
            qh, kh, vh = q[:, lo:lo + D_K], k[:, lo:lo + D_K], v[:, lo:lo + D_K]
            s = (qh @ kh.T) / math.sqrt(D_K)
            s = jnp.where(mask == 0.0, -1e9, s)
            p = jax.nn.softmax(s, axis=-1)
            heads.append(p @ vh)
        return jnp.concatenate(heads, axis=-1) @ wo

    def one_layer(xb, eb, p):
        (wq1, wk1, wv1, wo1, wq2, wk2, wv2, wo2,
         w1, b1, w2, b2, a1, g1, a2, g2, a3, g3) = p
        xn = ln(xb, a1, g1)
        xb = xb + mha(xn, xn, xn, tgt_mask, wq1, wk1, wv1, wo1)
        xn = ln(xb, a2, g2)
        xb = xb + mha(xn, eb, eb, src_mask, wq2, wk2, wv2, wo2)
        xn = ln(xb, a3, g3)
        hid = jnp.maximum(xn @ w1 + b1, 0.0)
        return xb + (hid @ w2 + b2)

    def one_batch(xb, eb):
        for p in layer_params:
            xb = one_layer(xb, eb, p)
        return xb

    return jax.vmap(one_batch)(x, enc)


if __name__ == "__main__":
    key = jax.random.PRNGKey(0)
    lkeys = jax.random.split(key, N_LAYERS + 1)

    def w(k, shape, fan_in):
        return jax.random.normal(k, shape, jnp.float32) / math.sqrt(fan_in)

    layer_params = []
    for li in range(N_LAYERS):
        ks = jax.random.split(lkeys[li], 12)
        # attention projections stored (in, out): y = x @ W  (== torch x @ W.T)
        wq1 = w(ks[0], (D_MODEL, D_MODEL), D_MODEL)
        wk1 = w(ks[1], (D_MODEL, D_MODEL), D_MODEL)
        wv1 = w(ks[2], (D_MODEL, D_MODEL), D_MODEL)
        wo1 = w(ks[3], (D_MODEL, D_MODEL), D_MODEL)
        wq2 = w(ks[4], (D_MODEL, D_MODEL), D_MODEL)
        wk2 = w(ks[5], (D_MODEL, D_MODEL), D_MODEL)
        wv2 = w(ks[6], (D_MODEL, D_MODEL), D_MODEL)
        wo2 = w(ks[7], (D_MODEL, D_MODEL), D_MODEL)
        # feed-forward (with biases, like nn.Linear defaults)
        w1 = w(ks[8], (D_MODEL, D_FF), D_MODEL)
        b1 = 0.01 * jax.random.normal(ks[9], (D_FF,), jnp.float32)
        w2 = w(ks[10], (D_FF, D_MODEL), D_FF)
        b2 = 0.01 * jax.random.normal(ks[11], (D_MODEL,), jnp.float32)
        # LayerNormalization params: torch init -> alpha = ones, bias = ones
        ones = jnp.ones((D_MODEL,), jnp.float32)
        layer_params.append((wq1, wk1, wv1, wo1, wq2, wk2, wv2, wo2,
                             w1, b1, w2, b2, ones, ones, ones, ones, ones, ones))

    dkeys = jax.random.split(lkeys[N_LAYERS], 2)
    x = jax.random.normal(dkeys[0], (B, S_TGT, D_MODEL), jnp.float32)
    enc = jax.random.normal(dkeys[1], (B, S_SRC, D_MODEL), jnp.float32)
    # tgt mask: causal; src mask: all ones (no padding). 1.0 = keep, 0.0 = mask.
    tgt_mask = jnp.tril(jnp.ones((S_TGT, S_TGT), jnp.float32))
    src_mask = jnp.ones((S_TGT, S_SRC), jnp.float32)

    # One-time packing at init (not in the per-call hot path).
    wpack, vpack, masks = pack_decoder_stack(layer_params, src_mask, tgt_mask)

    out = decoder_stack(x, enc, wpack, vpack, masks)
    out = jax.block_until_ready(out)

    ref = decoder_stack_ref(x, enc, src_mask, tgt_mask, layer_params)
    assert out.shape == (B, S_TGT, D_MODEL)
    assert jnp.allclose(out, ref, atol=1e-4, rtol=1e-4), "mismatch vs JAX reference"

    print("KERNEL_OK")
</pallas_src>

<mosaic_0001>
module attributes {stable_mosaic.version = 11 : i64} {
  func.func @decoder_layer_kernel(%arg0: i32, %arg1: memref<48x32xf32, #tpu.memory_space<vmem>>, %arg2: memref<1x320x128xf32, #tpu.memory_space<vmem>>, %arg3: memref<1x8x128xf32, #tpu.memory_space<vmem>>, %arg4: memref<16x32xf32, #tpu.memory_space<vmem>>) attributes {dimension_semantics = [#tpu.dimension_semantics<arbitrary>], iteration_bounds = array<i64: 2>, scalar_prefetch = 0 : i64, scratch_operands = 0 : i64, tpu.core_type = #tpu.core_type<tc>, window_params = [{pipeline_mode = #tpu.pipeline_mode<synchronous>, transform_indices = @transform_0, window_bounds = array<i64: 48, 32>}, {transform_indices = @transform_1, window_bounds = array<i64: 1, 320, 128>}, {transform_indices = @transform_2, window_bounds = array<i64: 1, 8, 128>}, {pipeline_mode = #tpu.pipeline_mode<synchronous>, transform_indices = @transform_3, window_bounds = array<i64: 16, 32>}]} {
    %c0_i32 = arith.constant 0 : i32
    %0 = arith.cmpi eq, %arg0, %c0_i32 : i32
    %1 = arith.extui %0 : i1 to i32
    %c0_i32_0 = arith.constant 0 : i32
    %2 = arith.cmpi ne, %1, %c0_i32_0 : i32
    scf.if %2 {
      %c0_70 = arith.constant 0 : index
      %c0_71 = arith.constant 0 : index
      %239 = vector.load %arg1[%c0_70, %c0_71] : memref<48x32xf32, #tpu.memory_space<vmem>>, vector<16x32xf32>
      %c0_72 = arith.constant 0 : index
      %c0_73 = arith.constant 0 : index
      %240 = vector.load %arg4[%c0_72, %c0_73] : memref<16x32xf32, #tpu.memory_space<vmem>>, vector<16x32xf32>
      tpu.vector_store %arg4[%c0_72, %c0_73], %239 {strides = array<i32>} : memref<16x32xf32, #tpu.memory_space<vmem>>, vector<16x32xf32>,
    } else {
    }
    %c0 = arith.constant 0 : index
    %c0_1 = arith.constant 0 : index
    %3 = vector.load %arg4[%c0, %c0_1] : memref<16x32xf32, #tpu.memory_space<vmem>>, vector<16x32xf32>
    %c16 = arith.constant 16 : index
    %c0_2 = arith.constant 0 : index
    %4 = vector.load %arg1[%c16, %c0_2] : memref<48x32xf32, #tpu.memory_space<vmem>>, vector<16x32xf32>
    %c32 = arith.constant 32 : index
    %c0_3 = arith.constant 0 : index
    %5 = vector.load %arg1[%c32, %c0_3] : memref<48x32xf32, #tpu.memory_space<vmem>>, vector<8x8xf32>
    %c40 = arith.constant 40 : index
    %c0_4 = arith.constant 0 : index
    %6 = vector.load %arg1[%c40, %c0_4] : memref<48x32xf32, #tpu.memory_space<vmem>>, vector<8x8xf32>
    %c0_5 = arith.constant 0 : index
    %c0_6 = arith.constant 0 : index
    %c0_7 = arith.constant 0 : index
    %7 = vector.load %arg3[%c0_5, %c0_6, %c0_7] : memref<1x8x128xf32, #tpu.memory_space<vmem>>, vector<1x1x32xf32>
    %8 = vector.shape_cast %7 : vector<1x1x32xf32> to vector<1x32xf32>
    %c0_8 = arith.constant 0 : index
    %c1 = arith.constant 1 : index
    %c0_9 = arith.constant 0 : index
    %9 = vector.load %arg3[%c0_8, %c1, %c0_9] : memref<1x8x128xf32, #tpu.memory_space<vmem>>, vector<1x1x32xf32>
    %10 = vector.shape_cast %9 : vector<1x1x32xf32> to vector<1x32xf32>
    %c0_10 = arith.constant 0 : index
    %c2 = arith.constant 2 : index
    %c0_11 = arith.constant 0 : index
    %11 = vector.load %arg3[%c0_10, %c2, %c0_11] : memref<1x8x128xf32, #tpu.memory_space<vmem>>, vector<1x1x32xf32>
    %12 = vector.shape_cast %11 : vector<1x1x32xf32> to vector<1x32xf32>
    %c0_12 = arith.constant 0 : index
    %c3 = arith.constant 3 : index
    %c0_13 = arith.constant 0 : index
    %13 = vector.load %arg3[%c0_12, %c3, %c0_13] : memref<1x8x128xf32, #tpu.memory_space<vmem>>, vector<1x1x32xf32>
    %14 = vector.shape_cast %13 : vector<1x1x32xf32> to vector<1x32xf32>
    %c0_14 = arith.constant 0 : index
    %c4 = arith.constant 4 : index
    %c0_15 = arith.constant 0 : index
    %15 = vector.load %arg3[%c0_14, %c4, %c0_15] : memref<1x8x128xf32, #tpu.memory_space<vmem>>, vector<1x1x32xf32>
    %16 = vector.shape_cast %15 : vector<1x1x32xf32> to vector<1x32xf32>
    %c0_16 = arith.constant 0 : index
    %c5 = arith.constant 5 : index
    %c0_17 = arith.constant 0 : index
    %17 = vector.load %arg3[%c0_16, %c5, %c0_17] : memref<1x8x128xf32, #tpu.memory_space<vmem>>, vector<1x1x32xf32>
    %18 = vector.shape_cast %17 : vector<1x1x32xf32> to vector<1x32xf32>
    %c0_18 = arith.constant 0 : index
    %c6 = arith.constant 6 : index
    %c0_19 = arith.constant 0 : index
    %19 = vector.load %arg3[%c0_18, %c6, %c0_19] : memref<1x8x128xf32, #tpu.memory_space<vmem>>, vector<1x1x128xf32>
    %20 = vector.shape_cast %19 : vector<1x1x128xf32> to vector<1x128xf32>
    %c0_20 = arith.constant 0 : index
    %c7 = arith.constant 7 : index
    %c0_21 = arith.constant 0 : index
    %21 = vector.load %arg3[%c0_20, %c7, %c0_21] : memref<1x8x128xf32, #tpu.memory_space<vmem>>, vector<1x1x32xf32>
    %22 = vector.shape_cast %21 : vector<1x1x32xf32> to vector<1x32xf32>
    %cst = arith.constant dense<0.000000e+00> : vector<16xf32>
    %23 = vector.multi_reduction <add>, %3, %cst [1] : vector<16x32xf32> to vector<16xf32>
    %24 = vector.shape_cast %23 : vector<16xf32> to vector<16x1xf32>
    %cst_22 = arith.constant 3.200000e+01 : f32
    %25 = vector.broadcast %cst_22 : f32 to vector<16x1xf32>
    %26 = arith.divf %24, %25 : vector<16x1xf32>
    %27 = vector.broadcast %26 : vector<16x1xf32> to vector<16x32xf32>
    %28 = arith.subf %3, %27 : vector<16x32xf32>
    %29 = arith.mulf %28, %28 : vector<16x32xf32>
    %cst_23 = arith.constant dense<0.000000e+00> : vector<16xf32>
    %30 = vector.multi_reduction <add>, %29, %cst_23 [1] : vector<16x32xf32> to vector<16xf32>
    %31 = vector.shape_cast %30 : vector<16xf32> to vector<16x1xf32>
    %cst_24 = arith.constant 3.100000e+01 : f32
    %32 = vector.broadcast %cst_24 : f32 to vector<16x1xf32>
    %33 = arith.divf %31, %32 : vector<16x1xf32>
    %34 = math.sqrt %33 : vector<16x1xf32>
    %35 = vector.broadcast %26 : vector<16x1xf32> to vector<16x32xf32>
    %36 = arith.subf %3, %35 : vector<16x32xf32>
    %37 = vector.broadcast %8 : vector<1x32xf32> to vector<16x32xf32>
    %38 = arith.mulf %37, %36 : vector<16x32xf32>
    %cst_25 = arith.constant 9.99999997E-7 : f32
    %39 = vector.broadcast %cst_25 : f32 to vector<16x1xf32>
    %40 = arith.addf %34, %39 : vector<16x1xf32>
    %41 = vector.broadcast %40 : vector<16x1xf32> to vector<16x32xf32>
    %42 = arith.divf %38, %41 : vector<16x32xf32>
    %43 = vector.broadcast %10 : vector<1x32xf32> to vector<16x32xf32>
    %44 = arith.addf %42, %43 : vector<16x32xf32>
    %c0_26 = arith.constant 0 : index
    %c0_27 = arith.constant 0 : index
    %c0_28 = arith.constant 0 : index
    %45 = vector.load %arg2[%c0_26, %c0_27, %c0_28] : memref<1x320x128xf32, #tpu.memory_space<vmem>>, vector<1x32x128xf32>
    %46 = vector.shape_cast %45 : vector<1x32x128xf32> to vector<32x128xf32>
    %cst_29 = arith.constant dense<0.000000e+00> : vector<16x128xf32>
    %47 = tpu.matmul %44, %46, %cst_29 {dimension_numbers = #tpu.dot_dimension_numbers<[1], [0], [0], [1], [0, 0, 1, 1], [], []>} : vector<16x32xf32>, vector<32x128xf32>, vector<16x128xf32> -> vector<16x128xf32>
    %c0_30 = arith.constant 0 : index
    %c32_31 = arith.constant 32 : index
    %c0_32 = arith.constant 0 : index
    %48 = vector.load %arg2[%c0_30, %c32_31, %c0_32] : memref<1x320x128xf32, #tpu.memory_space<vmem>>, vector<1x32x128xf32>
    %49 = vector.shape_cast %48 : vector<1x32x128xf32> to vector<32x128xf32>
    %50 = vector.shape_cast %47 : vector<16x128xf32> to vector<2x8x128xf32>
    %51 = vector.extract_strided_slice %50 {offsets = [0, 0, 0], sizes = [2, 8, 8], strides = [1, 1, 1]} : vector<2x8x128xf32> to vector<2x8x8xf32>
    %52 = vector.extract_strided_slice %50 {offsets = [0, 0, 8], sizes = [2, 8, 8], strides = [1, 1, 1]} : vector<2x8x128xf32> to vector<2x8x8xf32>
    %53 = vector.extract_strided_slice %50 {offsets = [0, 0, 16], sizes = [2, 8, 8], strides = [1, 1, 1]} : vector<2x8x128xf32> to vector<2x8x8xf32>
    %54 = vector.extract_strided_slice %50 {offsets = [0, 0, 24], sizes = [2, 8, 8], strides = [1, 1, 1]} : vector<2x8x128xf32> to vector<2x8x8xf32>
    %55 = vector.shape_cast %51 : vector<2x8x8xf32> to vector<1x2x8x8xf32>
    %56 = vector.shape_cast %52 : vector<2x8x8xf32> to vector<1x2x8x8xf32>
    %57 = vector.shape_cast %53 : vector<2x8x8xf32> to vector<1x2x8x8xf32>
    %58 = vector.shape_cast %54 : vector<2x8x8xf32> to vector<1x2x8x8xf32>
    %59 = tpu.concatenate %55, %56, %57, %58 in 0 : vector<1x2x8x8xf32>, vector<1x2x8x8xf32>, vector<1x2x8x8xf32>, vector<1x2x8x8xf32> -> vector<4x2x8x8xf32>
    %60 = vector.shape_cast %59 : vector<4x2x8x8xf32> to vector<8x8x8xf32>
    %61 = vector.shape_cast %47 : vector<16x128xf32> to vector<2x8x128xf32>
    %62 = vector.extract_strided_slice %61 {offsets = [0, 0, 32], sizes = [2, 8, 8], strides = [1, 1, 1]} : vector<2x8x128xf32> to vector<2x8x8xf32>
    %63 = vector.extract_strided_slice %61 {offsets = [0, 0, 40], sizes = [2, 8, 8], strides = [1, 1, 1]} : vector<2x8x128xf32> to vector<2x8x8xf32>
    %64 = vector.extract_strided_slice %61 {offsets = [0, 0, 48], sizes = [2, 8, 8], strides = [1, 1, 1]} : vector<2x8x128xf32> to vector<2x8x8xf32>
    %65 = vector.extract_strided_slice %61 {offsets = [0, 0, 56], sizes = [2, 8, 8], strides = [1, 1, 1]} : vector<2x8x128xf32> to vector<2x8x8xf32>
    %66 = vector.shape_cast %62 : vector<2x8x8xf32> to vector<1x2x8x8xf32>
    %67 = vector.shape_cast %63 : vector<2x8x8xf32> to vector<1x2x8x8xf32>
    %68 = vector.shape_cast %64 : vector<2x8x8xf32> to vector<1x2x8x8xf32>
    %69 = vector.shape_cast %65 : vector<2x8x8xf32> to vector<1x2x8x8xf32>
    %70 = tpu.concatenate %66, %67, %68, %69 in 0 : vector<1x2x8x8xf32>, vector<1x2x8x8xf32>, vector<1x2x8x8xf32>, vector<1x2x8x8xf32> -> vector<4x2x8x8xf32>
    %71 = vector.shape_cast %70 : vector<4x2x8x8xf32> to vector<8x8x8xf32>
    %72 = vector.shape_cast %47 : vector<16x128xf32> to vector<2x8x128xf32>
    %73 = vector.extract_strided_slice %72 {offsets = [0, 0, 64], sizes = [2, 8, 8], strides = [1, 1, 1]} : vector<2x8x128xf32> to vector<2x8x8xf32>
    %74 = vector.extract_strided_slice %72 {offsets = [0, 0, 72], sizes = [2, 8, 8], strides = [1, 1, 1]} : vector<2x8x128xf32> to vector<2x8x8xf32>
    %75 = vector.extract_strided_slice %72 {offsets = [0, 0, 80], sizes = [2, 8, 8], strides = [1, 1, 1]} : vector<2x8x128xf32> to vector<2x8x8xf32>
    %76 = vector.extract_strided_slice %72 {offsets = [0, 0, 88], sizes = [2, 8, 8], strides = [1, 1, 1]} : vector<2x8x128xf32> to vector<2x8x8xf32>
    %77 = vector.shape_cast %73 : vector<2x8x8xf32> to vector<1x2x8x8xf32>
    %78 = vector.shape_cast %74 : vector<2x8x8xf32> to vector<1x2x8x8xf32>
    %79 = vector.shape_cast %75 : vector<2x8x8xf32> to vector<1x2x8x8xf32>
    %80 = vector.shape_cast %76 : vector<2x8x8xf32> to vector<1x2x8x8xf32>
    %81 = tpu.concatenate %77, %78, %79, %80 in 0 : vector<1x2x8x8xf32>, vector<1x2x8x8xf32>, vector<1x2x8x8xf32>, vector<1x2x8x8xf32> -> vector<4x2x8x8xf32>
    %82 = vector.shape_cast %81 : vector<4x2x8x8xf32> to vector<8x8x8xf32>
    "tpu.trace_start"() <{level = 10 : i32, message = "nqd,nkd->nqk"}> : () -> ()
    %cst_33 = arith.constant dense<0.000000e+00> : vector<8x8x8xf32>
    %83 = tpu.matmul %60, %71, %cst_33 {dimension_numbers = #tpu.dot_dimension_numbers<[2], [2], [1], [1], [0, 0, 0, 1, 1, 1], [0], [0]>} : vector<8x8x8xf32>, vector<8x8x8xf32>, vector<8x8x8xf32> -> vector<8x8x8xf32>
    "tpu.trace_stop"() : () -> ()
    %84 = vector.shape_cast %5 : vector<8x8xf32> to vector<1x8x8xf32>
    %85 = vector.broadcast %84 : vector<1x8x8xf32> to vector<8x8x8xf32>
    %86 = arith.addf %83, %85 : vector<8x8x8xf32>
    %cst_34 = arith.constant dense<0xFF800000> : vector<8x8xf32>
    %87 = vector.multi_reduction <maximumf>, %86, %cst_34 [2] : vector<8x8x8xf32> to vector<8x8xf32>
    %88 = vector.shape_cast %87 : vector<8x8xf32> to vector<8x8x1xf32>
    %89 = vector.broadcast %88 : vector<8x8x1xf32> to vector<8x8x8xf32>
    %90 = arith.subf %86, %89 : vector<8x8x8xf32>
    %91 = math.exp %90 : vector<8x8x8xf32>
    %cst_35 = arith.constant dense<0.000000e+00> : vector<8x8xf32>
    %92 = vector.multi_reduction <add>, %91, %cst_35 [2] : vector<8x8x8xf32> to vector<8x8xf32>
    %93 = vector.shape_cast %92 : vector<8x8xf32> to vector<8x8x1xf32>
    %94 = vector.broadcast %93 : vector<8x8x1xf32> to vector<8x8x8xf32>
    %95 = arith.divf %91, %94 : vector<8x8x8xf32>
    "tpu.trace_start"() <{level = 10 : i32, message = "nqk,nkd->nqd"}> : () -> ()
    %cst_36 = arith.constant dense<0.000000e+00> : vector<8x8x8xf32>
    %96 = tpu.matmul %95, %82, %cst_36 {dimension_numbers = #tpu.dot_dimension_numbers<[2], [1], [1], [2], [0, 0, 0, 1, 1, 2], [0], [0]>} : vector<8x8x8xf32>, vector<8x8x8xf32>, vector<8x8x8xf32> -> vector<8x8x8xf32>
    "tpu.trace_stop"() : () -> ()
    %97 = vector.shape_cast %96 : vector<8x8x8xf32> to vector<4x2x8x8xf32>
    %98 = vector.extract_strided_slice %97 {offsets = [0, 0, 0, 0], sizes = [1, 2, 8, 8], strides = [1, 1, 1, 1]} : vector<4x2x8x8xf32> to vector<1x2x8x8xf32>
    %99 = vector.shape_cast %98 : vector<1x2x8x8xf32> to vector<2x8x8xf32>
    %100 = vector.extract_strided_slice %97 {offsets = [1, 0, 0, 0], sizes = [1, 2, 8, 8], strides = [1, 1, 1, 1]} : vector<4x2x8x8xf32> to vector<1x2x8x8xf32>
    %101 = vector.shape_cast %100 : vector<1x2x8x8xf32> to vector<2x8x8xf32>
    %102 = vector.extract_strided_slice %97 {offsets = [2, 0, 0, 0], sizes = [1, 2, 8, 8], strides = [1, 1, 1, 1]} : vector<4x2x8x8xf32> to vector<1x2x8x8xf32>
    %103 = vector.shape_cast %102 : vector<1x2x8x8xf32> to vector<2x8x8xf32>
    %104 = vector.extract_strided_slice %97 {offsets = [3, 0, 0, 0], sizes = [1, 2, 8, 8], strides = [1, 1, 1, 1]} : vector<4x2x8x8xf32> to vector<1x2x8x8xf32>
    %105 = vector.shape_cast %104 : vector<1x2x8x8xf32> to vector<2x8x8xf32>
    %106 = tpu.concatenate %99, %101, %103, %105 in 2 : vector<2x8x8xf32>, vector<2x8x8xf32>, vector<2x8x8xf32>, vector<2x8x8xf32> -> vector<2x8x32xf32>
    %107 = vector.shape_cast %106 : vector<2x8x32xf32> to vector<16x32xf32>
    %cst_37 = arith.constant dense<0.000000e+00> : vector<16x128xf32>
    %108 = tpu.matmul %107, %49, %cst_37 {dimension_numbers = #tpu.dot_dimension_numbers<[1], [0], [0], [1], [0, 0, 1, 1], [], []>} : vector<16x32xf32>, vector<32x128xf32>, vector<16x128xf32> -> vector<16x128xf32>
    %109 = vector.extract_strided_slice %108 {offsets = [0, 0], sizes = [16, 32], strides = [1, 1]} : vector<16x128xf32> to vector<16x32xf32>
    %110 = arith.addf %3, %109 : vector<16x32xf32>
    %cst_38 = arith.constant dense<0.000000e+00> : vector<16xf32>
    %111 = vector.multi_reduction <add>, %110, %cst_38 [1] : vector<16x32xf32> to vector<16xf32>
    %112 = vector.shape_cast %111 : vector<16xf32> to vector<16x1xf32>
    %cst_39 = arith.constant 3.200000e+01 : f32
    %113 = vector.broadcast %cst_39 : f32 to vector<16x1xf32>
    %114 = arith.divf %112, %113 : vector<16x1xf32>
    %115 = vector.broadcast %114 : vector<16x1xf32> to vector<16x32xf32>
    %116 = arith.subf %110, %115 : vector<16x32xf32>
    %117 = arith.mulf %116, %116 : vector<16x32xf32>
    %cst_40 = arith.constant dense<0.000000e+00> : vector<16xf32>
    %118 = vector.multi_reduction <add>, %117, %cst_40 [1] : vector<16x32xf32> to vector<16xf32>
    %119 = vector.shape_cast %118 : vector<16xf32> to vector<16x1xf32>
    %cst_41 = arith.constant 3.100000e+01 : f32
    %120 = vector.broadcast %cst_41 : f32 to vector<16x1xf32>
    %121 = arith.divf %119, %120 : vector<16x1xf32>
    %122 = math.sqrt %121 : vector<16x1xf32>
    %123 = vector.broadcast %114 : vector<16x1xf32> to vector<16x32xf32>
    %124 = arith.subf %110, %123 : vector<16x32xf32>
    %125 = vector.broadcast %12 : vector<1x32xf32> to vector<16x32xf32>
    %126 = arith.mulf %125, %124 : vector<16x32xf32>
    %cst_42 = arith.constant 9.99999997E-7 : f32
    %127 = vector.broadcast %cst_42 : f32 to vector<16x1xf32>
    %128 = arith.addf %122, %127 : vector<16x1xf32>
    %129 = vector.broadcast %128 : vector<16x1xf32> to vector<16x32xf32>
    %130 = arith.divf %126, %129 : vector<16x32xf32>
    %131 = vector.broadcast %14 : vector<1x32xf32> to vector<16x32xf32>
    %132 = arith.addf %130, %131 : vector<16x32xf32>
    %c0_43 = arith.constant 0 : index
    %c64 = arith.constant 64 : index
    %c0_44 = arith.constant 0 : index
    %133 = vector.load %arg2[%c0_43, %c64, %c0_44] : memref<1x320x128xf32, #tpu.memory_space<vmem>>, vector<1x32x128xf32>
    %134 = vector.shape_cast %133 : vector<1x32x128xf32> to vector<32x128xf32>
    %cst_45 = arith.constant dense<0.000000e+00> : vector<16x128xf32>
    %135 = tpu.matmul %132, %134, %cst_45 {dimension_numbers = #tpu.dot_dimension_numbers<[1], [0], [0], [1], [0, 0, 1, 1], [], []>} : vector<16x32xf32>, vector<32x128xf32>, vector<16x128xf32> -> vector<16x128xf32>
    %c0_46 = arith.constant 0 : index
    %c96 = arith.constant 96 : index
    %c0_47 = arith.constant 0 : index
    %136 = vector.load %arg2[%c0_46, %c96, %c0_47] : memref<1x320x128xf32, #tpu.memory_space<vmem>>, vector<1x32x128xf32>
    %137 = vector.shape_cast %136 : vector<1x32x128xf32> to vector<32x128xf32>
    %cst_48 = arith.constant dense<0.000000e+00> : vector<16x128xf32>
    %138 = tpu.matmul %4, %137, %cst_48 {dimension_numbers = #tpu.dot_dimension_numbers<[1], [0], [0], [1], [0, 0, 1, 1], [], []>} : vector<16x32xf32>, vector<32x128xf32>, vector<16x128xf32> -> vector<16x128xf32>
    %c0_49 = arith.constant 0 : index
    %c128 = arith.constant 128 : index
    %c0_50 = arith.constant 0 : index
    %139 = vector.load %arg2[%c0_49, %c128, %c0_50] : memref<1x320x128xf32, #tpu.memory_space<vmem>>, vector<1x32x128xf32>
    %140 = vector.shape_cast %139 : vector<1x32x128xf32> to vector<32x128xf32>
    %141 = vector.shape_cast %135 : vector<16x128xf32> to vector<2x8x128xf32>
    %142 = vector.extract_strided_slice %141 {offsets = [0, 0, 0], sizes = [2, 8, 8], strides = [1, 1, 1]} : vector<2x8x128xf32> to vector<2x8x8xf32>
    %143 = vector.extract_strided_slice %141 {offsets = [0, 0, 8], sizes = [2, 8, 8], strides = [1, 1, 1]} : vector<2x8x128xf32> to vector<2x8x8xf32>
    %144 = vector.extract_strided_slice %141 {offsets = [0, 0, 16], sizes = [2, 8, 8], strides = [1, 1, 1]} : vector<2x8x128xf32> to vector<2x8x8xf32>
    %145 = vector.extract_strided_slice %141 {offsets = [0, 0, 24], sizes = [2, 8, 8], strides = [1, 1, 1]} : vector<2x8x128xf32> to vector<2x8x8xf32>
    %146 = vector.shape_cast %142 : vector<2x8x8xf32> to vector<1x2x8x8xf32>
    %147 = vector.shape_cast %143 : vector<2x8x8xf32> to vector<1x2x8x8xf32>
    %148 = vector.shape_cast %144 : vector<2x8x8xf32> to vector<1x2x8x8xf32>
    %149 = vector.shape_cast %145 : vector<2x8x8xf32> to vector<1x2x8x8xf32>
    %150 = tpu.concatenate %146, %147, %148, %149 in 0 : vector<1x2x8x8xf32>, vector<1x2x8x8xf32>, vector<1x2x8x8xf32>, vector<1x2x8x8xf32> -> vector<4x2x8x8xf32>
    %151 = vector.shape_cast %150 : vector<4x2x8x8xf32> to vector<8x8x8xf32>
    %152 = vector.shape_cast %138 : vector<16x128xf32> to vector<2x8x128xf32>
    %153 = vector.extract_strided_slice %152 {offsets = [0, 0, 0], sizes = [2, 8, 8], strides = [1, 1, 1]} : vector<2x8x128xf32> to vector<2x8x8xf32>
    %154 = vector.extract_strided_slice %152 {offsets = [0, 0, 8], sizes = [2, 8, 8], strides = [1, 1, 1]} : vector<2x8x128xf32> to vector<2x8x8xf32>
    %155 = vector.extract_strided_slice %152 {offsets = [0, 0, 16], sizes = [2, 8, 8], strides = [1, 1, 1]} : vector<2x8x128xf32> to vector<2x8x8xf32>
    %156 = vector.extract_strided_slice %152 {offsets = [0, 0, 24], sizes = [2, 8, 8], strides = [1, 1, 1]} : vector<2x8x128xf32> to vector<2x8x8xf32>
    %157 = vector.shape_cast %153 : vector<2x8x8xf32> to vector<1x2x8x8xf32>
    %158 = vector.shape_cast %154 : vector<2x8x8xf32> to vector<1x2x8x8xf32>
    %159 = vector.shape_cast %155 : vector<2x8x8xf32> to vector<1x2x8x8xf32>
    %160 = vector.shape_cast %156 : vector<2x8x8xf32> to vector<1x2x8x8xf32>
    %161 = tpu.concatenate %157, %158, %159, %160 in 0 : vector<1x2x8x8xf32>, vector<1x2x8x8xf32>, vector<1x2x8x8xf32>, vector<1x2x8x8xf32> -> vector<4x2x8x8xf32>
    %162 = vector.shape_cast %161 : vector<4x2x8x8xf32> to vector<8x8x8xf32>
    %163 = vector.shape_cast %138 : vector<16x128xf32> to vector<2x8x128xf32>
    %164 = vector.extract_strided_slice %163 {offsets = [0, 0, 32], sizes = [2, 8, 8], strides = [1, 1, 1]} : vector<2x8x128xf32> to vector<2x8x8xf32>
    %165 = vector.extract_strided_slice %163 {offsets = [0, 0, 40], sizes = [2, 8, 8], strides = [1, 1, 1]} : vector<2x8x128xf32> to vector<2x8x8xf32>
    %166 = vector.extract_strided_slice %163 {offsets = [0, 0, 48], sizes = [2, 8, 8], strides = [1, 1, 1]} : vector<2x8x128xf32> to vector<2x8x8xf32>
    %167 = vector.extract_strided_slice %163 {offsets = [0, 0, 56], sizes = [2, 8, 8], strides = [1, 1, 1]} : vector<2x8x128xf32> to vector<2x8x8xf32>
    %168 = vector.shape_cast %164 : vector<2x8x8xf32> to vector<1x2x8x8xf32>
    %169 = vector.shape_cast %165 : vector<2x8x8xf32> to vector<1x2x8x8xf32>
    %170 = vector.shape_cast %166 : vector<2x8x8xf32> to vector<1x2x8x8xf32>
    %171 = vector.shape_cast %167 : vector<2x8x8xf32> to vector<1x2x8x8xf32>
    %172 = tpu.concatenate %168, %169, %170, %171 in 0 : vector<1x2x8x8xf32>, vector<1x2x8x8xf32>, vector<1x2x8x8xf32>, vector<1x2x8x8xf32> -> vector<4x2x8x8xf32>
    %173 = vector.shape_cast %172 : vector<4x2x8x8xf32> to vector<8x8x8xf32>
    "tpu.trace_start"() <{level = 10 : i32, message = "nqd,nkd->nqk"}> : () -> ()
    %cst_51 = arith.constant dense<0.000000e+00> : vector<8x8x8xf32>
    %174 = tpu.matmul %151, %162, %cst_51 {dimension_numbers = #tpu.dot_dimension_numbers<[2], [2], [1], [1], [0, 0, 0, 1, 1, 1], [0], [0]>} : vector<8x8x8xf32>, vector<8x8x8xf32>, vector<8x8x8xf32> -> vector<8x8x8xf32>
    "tpu.trace_stop"() : () -> ()
    %175 = vector.shape_cast %6 : vector<8x8xf32> to vector<1x8x8xf32>
    %176 = vector.broadcast %175 : vector<1x8x8xf32> to vector<8x8x8xf32>
    %177 = arith.addf %174, %176 : vector<8x8x8xf32>
    %cst_52 = arith.constant dense<0xFF800000> : vector<8x8xf32>
    %178 = vector.multi_reduction <maximumf>, %177, %cst_52 [2] : vector<8x8x8xf32> to vector<8x8xf32>
    %179 = vector.shape_cast %178 : vector<8x8xf32> to vector<8x8x1xf32>
    %180 = vector.broadcast %179 : vector<8x8x1xf32> to vector<8x8x8xf32>
    %181 = arith.subf %177, %180 : vector<8x8x8xf32>
    %182 = math.exp %181 : vector<8x8x8xf32>
    %cst_53 = arith.constant dense<0.000000e+00> : vector<8x8xf32>
    %183 = vector.multi_reduction <add>, %182, %cst_53 [2] : vector<8x8x8xf32> to vector<8x8xf32>
    %184 = vector.shape_cast %183 : vector<8x8xf32> to vector<8x8x1xf32>
    %185 = vector.broadcast %184 : vector<8x8x1xf32> to vector<8x8x8xf32>
    %186 = arith.divf %182, %185 : vector<8x8x8xf32>
    "tpu.trace_start"() <{level = 10 : i32, message = "nqk,nkd->nqd"}> : () -> ()
    %cst_54 = arith.constant dense<0.000000e+00> : vector<8x8x8xf32>
    %187 = tpu.matmul %186, %173, %cst_54 {dimension_numbers = #tpu.dot_dimension_numbers<[2], [1], [1], [2], [0, 0, 0, 1, 1, 2], [0], [0]>} : vector<8x8x8xf32>, vector<8x8x8xf32>, vector<8x8x8xf32> -> vector<8x8x8xf32>
    "tpu.trace_stop"() : () -> ()
    %188 = vector.shape_cast %187 : vector<8x8x8xf32> to vector<4x2x8x8xf32>
    %189 = vector.extract_strided_slice %188 {offsets = [0, 0, 0, 0], sizes = [1, 2, 8, 8], strides = [1, 1, 1, 1]} : vector<4x2x8x8xf32> to vector<1x2x8x8xf32>
    %190 = vector.shape_cast %189 : vector<1x2x8x8xf32> to vector<2x8x8xf32>
    %191 = vector.extract_strided_slice %188 {offsets = [1, 0, 0, 0], sizes = [1, 2, 8, 8], strides = [1, 1, 1, 1]} : vector<4x2x8x8xf32> to vector<1x2x8x8xf32>
    %192 = vector.shape_cast %191 : vector<1x2x8x8xf32> to vector<2x8x8xf32>
    %193 = vector.extract_strided_slice %188 {offsets = [2, 0, 0, 0], sizes = [1, 2, 8, 8], strides = [1, 1, 1, 1]} : vector<4x2x8x8xf32> to vector<1x2x8x8xf32>
    %194 = vector.shape_cast %193 : vector<1x2x8x8xf32> to vector<2x8x8xf32>
    %195 = vector.extract_strided_slice %188 {offsets = [3, 0, 0, 0], sizes = [1, 2, 8, 8], strides = [1, 1, 1, 1]} : vector<4x2x8x8xf32> to vector<1x2x8x8xf32>
    %196 = vector.shape_cast %195 : vector<1x2x8x8xf32> to vector<2x8x8xf32>
    %197 = tpu.concatenate %190, %192, %194, %196 in 2 : vector<2x8x8xf32>, vector<2x8x8xf32>, vector<2x8x8xf32>, vector<2x8x8xf32> -> vector<2x8x32xf32>
    %198 = vector.shape_cast %197 : vector<2x8x32xf32> to vector<16x32xf32>
    %cst_55 = arith.constant dense<0.000000e+00> : vector<16x128xf32>
    %199 = tpu.matmul %198, %140, %cst_55 {dimension_numbers = #tpu.dot_dimension_numbers<[1], [0], [0], [1], [0, 0, 1, 1], [], []>} : vector<16x32xf32>, vector<32x128xf32>, vector<16x128xf32> -> vector<16x128xf32>
    %200 = vector.extract_strided_slice %199 {offsets = [0, 0], sizes = [16, 32], strides = [1, 1]} : vector<16x128xf32> to vector<16x32xf32>
    %201 = arith.addf %110, %200 : vector<16x32xf32>
    %cst_56 = arith.constant dense<0.000000e+00> : vector<16xf32>
    %202 = vector.multi_reduction <add>, %201, %cst_56 [1] : vector<16x32xf32> to vector<16xf32>
    %203 = vector.shape_cast %202 : vector<16xf32> to vector<16x1xf32>
    %cst_57 = arith.constant 3.200000e+01 : f32
    %204 = vector.broadcast %cst_57 : f32 to vector<16x1xf32>
    %205 = arith.divf %203, %204 : vector<16x1xf32>
    %206 = vector.broadcast %205 : vector<16x1xf32> to vector<16x32xf32>
    %207 = arith.subf %201, %206 : vector<16x32xf32>
    %208 = arith.mulf %207, %207 : vector<16x32xf32>
    %cst_58 = arith.constant dense<0.000000e+00> : vector<16xf32>
    %209 = vector.multi_reduction <add>, %208, %cst_58 [1] : vector<16x32xf32> to vector<16xf32>
    %210 = vector.shape_cast %209 : vector<16xf32> to vector<16x1xf32>
    %cst_59 = arith.constant 3.100000e+01 : f32
    %211 = vector.broadcast %cst_59 : f32 to vector<16x1xf32>
    %212 = arith.divf %210, %211 : vector<16x1xf32>
    %213 = math.sqrt %212 : vector<16x1xf32>
    %214 = vector.broadcast %205 : vector<16x1xf32> to vector<16x32xf32>
    %215 = arith.subf %201, %214 : vector<16x32xf32>
    %216 = vector.broadcast %16 : vector<1x32xf32> to vector<16x32xf32>
    %217 = arith.mulf %216, %215 : vector<16x32xf32>
    %cst_60 = arith.constant 9.99999997E-7 : f32
    %218 = vector.broadcast %cst_60 : f32 to vector<16x1xf32>
    %219 = arith.addf %213, %218 : vector<16x1xf32>
    %220 = vector.broadcast %219 : vector<16x1xf32> to vector<16x32xf32>
    %221 = arith.divf %217, %220 : vector<16x32xf32>
    %222 = vector.broadcast %18 : vector<1x32xf32> to vector<16x32xf32>
    %223 = arith.addf %221, %222 : vector<16x32xf32>
    %c0_61 = arith.constant 0 : index
    %c160 = arith.constant 160 : index
    %c0_62 = arith.constant 0 : index
    %224 = vector.load %arg2[%c0_61, %c160, %c0_62] : memref<1x320x128xf32, #tpu.memory_space<vmem>>, vector<1x32x128xf32>
    %225 = vector.shape_cast %224 : vector<1x32x128xf32> to vector<32x128xf32>
    %cst_63 = arith.constant dense<0.000000e+00> : vector<16x128xf32>
    %226 = tpu.matmul %223, %225, %cst_63 {dimension_numbers = #tpu.dot_dimension_numbers<[1], [0], [0], [1], [0, 0, 1, 1], [], []>} : vector<16x32xf32>, vector<32x128xf32>, vector<16x128xf32> -> vector<16x128xf32>
    %227 = vector.broadcast %20 : vector<1x128xf32> to vector<16x128xf32>
    %228 = arith.addf %226, %227 : vector<16x128xf32>
    %cst_64 = arith.constant 0.000000e+00 : f32
    %229 = vector.broadcast %cst_64 : f32 to vector<16x128xf32>
    %230 = arith.maximumf %228, %229 : vector<16x128xf32>
    %c0_65 = arith.constant 0 : index
    %c192 = arith.constant 192 : index
    %c0_66 = arith.constant 0 : index
    %231 = vector.load %arg2[%c0_65, %c192, %c0_66] : memref<1x320x128xf32, #tpu.memory_space<vmem>>, vector<1x128x128xf32>
    %232 = vector.shape_cast %231 : vector<1x128x128xf32> to vector<128x128xf32>
    %cst_67 = arith.constant dense<0.000000e+00> : vector<16x128xf32>
    %233 = tpu.matmul %230, %232, %cst_67 {dimension_numbers = #tpu.dot_dimension_numbers<[1], [0], [0], [1], [0, 0, 1, 1], [], []>} : vector<16x128xf32>, vector<128x128xf32>, vector<16x128xf32> -> vector<16x128xf32>
    %234 = vector.extract_strided_slice %233 {offsets = [0, 0], sizes = [16, 32], strides = [1, 1]} : vector<16x128xf32> to vector<16x32xf32>
    %235 = arith.addf %201, %234 : vector<16x32xf32>
    %236 = vector.broadcast %22 : vector<1x32xf32> to vector<16x32xf32>
    %237 = arith.addf %235, %236 : vector<16x32xf32>
    %c0_68 = arith.constant 0 : index
    %c0_69 = arith.constant 0 : index
    %238 = vector.load %arg4[%c0_68, %c0_69] : memref<16x32xf32, #tpu.memory_space<vmem>>, vector<16x32xf32>
    tpu.vector_store %arg4[%c0_68, %c0_69], %237 {strides = array<i32>} : memref<16x32xf32, #tpu.memory_space<vmem>>, vector<16x32xf32>,
    return
  }
  func.func @transform_0(%arg0: i32) -> (i32, i32) {
    %c0_i32 = arith.constant 0 : i32
    %c0_i32_0 = arith.constant 0 : i32
    %c0_i32_1 = arith.constant 0 : i32
    return %c0_i32, %c0_i32_0 : i32, i32
  }
  func.func @transform_1(%arg0: i32) -> (i32, i32, i32) {
    %c0_i32 = arith.constant 0 : i32
    %c0_i32_0 = arith.constant 0 : i32
    %c0_i32_1 = arith.constant 0 : i32
    return %arg0, %c0_i32, %c0_i32_0 : i32, i32, i32
  }
  func.func @transform_2(%arg0: i32) -> (i32, i32, i32) {
    %c0_i32 = arith.constant 0 : i32
    %c0_i32_0 = arith.constant 0 : i32
    %c0_i32_1 = arith.constant 0 : i32
    return %arg0, %c0_i32, %c0_i32_0 : i32, i32, i32
  }
  func.func @transform_3(%arg0: i32) -> (i32, i32) {
    %c0_i32 = arith.constant 0 : i32
    %c0_i32_0 = arith.constant 0 : i32
    %c0_i32_1 = arith.constant 0 : i32
    return %c0_i32, %c0_i32_0 : i32, i32
  }
}

</mosaic_0001>

<llo_original>
// kernel: decoder_stack.1
$region0: #{decoder_stack.1}
  #allocation0 [shape = 'u32[]', space=smem, size = 0x4, offset = 0x4, fixed_abs, tag = 'smem constant byte address 0x4 - core index']
  #allocation1 [shape = 'u32[72,128]{1,0:T(1,128)}', space=vmem, size = 0x9000, scoped, tag = 'internal scratch']
  %s0 = inlined_call_operand.vmem [shape: f32[48,32], index: 0, kind: input, shape index: {}]
  %s1 = inlined_call_operand.hbm [shape: f32[2,320,128], index: 1, kind: input, shape index: {}]
  %s2 = inlined_call_operand.vmem [shape: f32[2,8,128], index: 2, kind: input, shape index: {}]
  %s3 = inlined_call_operand.hbm [shape: f32[16,32], index: 3, kind: output, shape index: {}]
  %s4 = sld [smem:[#allocation0]]
  $region53: #{decoder_stack.1} parent=0
    _
  %s6 = ssub.s32 1, %s4
  %s7 = scalar_select 0, %s6, %s4
  $region1: #{decoder_stack.1} parent=0
    #allocation2 [shape = 'u8[327680]{0}', space=vmem, size = 0x50000, scoped, tag = 'input window, operand 1']
    #allocation3 [shape = 's32[2]{0}', space=sflag, size = 0x8, scoped, tag = 'scoped memory for decoder_stack.1']
    #allocation4 [shape = 's32[2]{0}', space=sflag, size = 0x8, scoped, tag = 'scoped memory for decoder_stack.1']
    #allocation5 [shape = 'u8[8192]{0}', space=vmem, size = 0x2000, scoped, tag = 'output window, operand 0, single buffered']
    %8 = vsyncpa [#allocation3], 0
    %s9 = scalar_lea.sflag [#allocation3], 1
    %10 = vsyncpa %s9, 0
    %11 = vsyncpa [#allocation4], 0
    loop: start=0, step=1, limit=4
    $region2: #{decoder_stack.1} parent=1 // loop_pre_header
      _
    $region3: #{decoder_stack.1} parent=1 // loop_header
      %s13 = sphi 0, %s17
      %p14 = scmp.ge.s32.totalorder %s13, 4
      %s21 = sphi 0, %s21
      %s23 = sphi 0, %s21
      %s24 = sphi 0, %s23
      %s38 = sphi 0, %s24
      %s44 = sphi 0, %s46
      %s47 = sphi 0, %s44
      %s48 = sphi 0, %s47
      %s64 = sphi 0, %s48
      %s70 = sphi 0, %s72
      %s73 = sphi 0, %s70
      %s74 = sphi 0, %s73
      %s90 = sphi 0, %s74
      %s94 = sphi 0, %s94
      %s96 = sphi 0, %s94
      %s97 = sphi 0, %s96
      %s111 = sphi 0, %s97
    $region4: #{decoder_stack.1} parent=1 // loop_header_branch
      %16 = sbr.rel (%p14) target = $region8
    $region5: #{decoder_stack.1} parent=1 // loop_body
      %s18 = ssub.s32 %s13, 1
      %s19 = ssub.s32 %s13, 2
      %s20 = sadd.s32 %s13, 1
      %s22 = sadd.s32 %s21, 1
      %p25 = scmp.eq.s32.totalorder %s13, 1
      %p26 = scmp.ne.s32.totalorder %s21, %s23
      %p27 = scmp.eq.s32.totalorder %s13, 0
      %p28 = por %p26, %p27
      %p29 = scmp.ne.s32.totalorder %s21, %s23
      %p30 = scmp.eq.s32.totalorder %s18, 1
      %p31 = por %p29, %p30
      %p32 = scmp.ne.s32.totalorder %s23, %s24
      %p33 = scmp.eq.s32.totalorder %s18, 0
      %p34 = por %p32, %p33
      %p35 = scmp.ne.s32.totalorder %s23, %s24
      %p36 = scmp.eq.s32.totalorder %s19, 1
      %p37 = por %p35, %p36
      %p39 = scmp.ne.s32.totalorder %s24, %s38
      %p40 = scmp.eq.s32.totalorder %s19, 0
      %p41 = por %p39, %p40
      %s42 = ssub.s32 %s13, %s20
      %p43 = scmp.eq.s32.totalorder %s42, 0
      %s45 = sadd.s32 %s44, 1
      %s46 = scalar_select %p43, %s44, %s45
      %p49 = pneg %p43
      %p50 = scmp.eq.s32.totalorder %s13, 1
      %p51 = por %p49, %p50
      %p52 = scmp.ne.s32.totalorder %s44, %s47
      %p53 = scmp.eq.s32.totalorder %s13, 0
      %p54 = por %p52, %p53
      %p55 = scmp.ne.s32.totalorder %s44, %s47
      %p56 = scmp.eq.s32.totalorder %s18, 1
      %p57 = por %p55, %p56
      %p58 = scmp.ne.s32.totalorder %s47, %s48
      %p59 = scmp.eq.s32.totalorder %s18, 0
      %p60 = por %p58, %p59
      %p61 = scmp.ne.s32.totalorder %s47, %s48
      %p62 = scmp.eq.s32.totalorder %s19, 1
      %p63 = por %p61, %p62
      %p65 = scmp.ne.s32.totalorder %s48, %s64
      %p66 = scmp.eq.s32.totalorder %s19, 0
      %p67 = por %p65, %p66
      %s68 = ssub.s32 %s13, %s20
      %p69 = scmp.eq.s32.totalorder %s68, 0
      %s71 = sadd.s32 %s70, 1
      %s72 = scalar_select %p69, %s70, %s71
      %p75 = pneg %p69
      %p76 = scmp.eq.s32.totalorder %s13, 1
      %p77 = por %p75, %p76
      %p78 = scmp.ne.s32.totalorder %s70, %s73
      %p79 = scmp.eq.s32.totalorder %s13, 0
      %p80 = por %p78, %p79
      %p81 = scmp.ne.s32.totalorder %s70, %s73
      %p82 = scmp.eq.s32.totalorder %s18, 1
      %p83 = por %p81, %p82
      %p84 = scmp.ne.s32.totalorder %s73, %s74
      %p85 = scmp.eq.s32.totalorder %s18, 0
      %p86 = por %p84, %p85
      %p87 = scmp.ne.s32.totalorder %s73, %s74
      %p88 = scmp.eq.s32.totalorder %s19, 1
      %p89 = por %p87, %p88
      %p91 = scmp.ne.s32.totalorder %s74, %s90
      %p92 = scmp.eq.s32.totalorder %s19, 0
      %p93 = por %p91, %p92
      %s95 = sadd.s32 %s94, 1
      %p98 = scmp.eq.s32.totalorder %s13, 1
      %p99 = scmp.ne.s32.totalorder %s94, %s96
      %p100 = scmp.eq.s32.totalorder %s13, 0
      %p101 = por %p99, %p100
      %p102 = scmp.ne.s32.totalorder %s94, %s96
      %p103 = scmp.eq.s32.totalorder %s18, 1
      %p104 = por %p102, %p103
      %p105 = scmp.ne.s32.totalorder %s96, %s97
      %p106 = scmp.eq.s32.totalorder %s18, 0
      %p107 = por %p105, %p106
      %p108 = scmp.ne.s32.totalorder %s96, %s97
      %p109 = scmp.eq.s32.totalorder %s19, 1
      %p110 = por %p108, %p109
      %p112 = scmp.ne.s32.totalorder %s97, %s111
      %p113 = scmp.eq.s32.totalorder %s19, 0
      %p114 = por %p112, %p113
      %p115 = scmp.le.s32.totalorder 1, %s13
      %p116 = scmp.lt.s32.totalorder %s13, 3
      %p117 = pnand %p115, %p116
      %p118 = pneg %p117
      // Predicated region
      $region9: #{decoder_stack.1} parent=5 // pred_check
        _
      $region10: #{decoder_stack.1} parent=5 // pred_check_branch
        %120 = sbr.rel (%p117) target = $region12
      $region11: #{decoder_stack.1} parent=5 // pred_region
        %s121 = ssub.s32 %s13, 1
        // Predicated region
        $region13: #{decoder_stack.1} parent=11 // pred_check
          %p122 = pneg %p34
        $region14: #{decoder_stack.1} parent=11 // pred_check_branch
          %124 = sbr.rel (%p122) target = $region16
        $region15: #{decoder_stack.1} parent=11 // pred_region
          _
        $region16: #{decoder_stack.1} parent=11 // pred_fallthru
          _
      $region12: #{decoder_stack.1} parent=5 // pred_fallthru
        _
      %p125 = scmp.lt.s32.totalorder %s13, 2
      // Predicated region
      $region17: #{decoder_stack.1} parent=5 // pred_check
        %p126 = pneg %p125
      $region18: #{decoder_stack.1} parent=5 // pred_check_branch
        %128 = sbr.rel (%p126) target = $region20
      $region19: #{decoder_stack.1} parent=5 // pred_region
        // Predicated region
        $region21: #{decoder_stack.1} parent=19 // pred_check
          %p129 = pneg %p54
        $region22: #{decoder_stack.1} parent=19 // pred_check_branch
          %131 = sbr.rel (%p129) target = $region24
        $region23: #{decoder_stack.1} parent=19 // pred_region
          %s132 = sand.u32 %s44, 1
          %s133 = scalar_lea.sflag [#allocation3], %s132
          %s134 = sand.u32 %s44, 1
          %s135 = smul.addr %s134, 320
          %s136 = scalar_lea.vmem [#allocation2], %s135
          %138 = vsyncadd %s133, 0
          %s139 = smul.addr %s13, 40
          %s140 = smul.addr %s139, 8
          %s141 = scalar_lea.hbm %s1, %s140
          %s142 = sshll.u32 %s141, 4
          %s143 = int_to_ptr.hbm [resolvable:$true] %s142
          %s144 = sshll.u32 %s136, 4
          %s145 = int_to_ptr.vmem [resolvable:$true] %s144
          %150 = dma.hbm_to_vmem [thread:$0]  %s143, 5120, %s145, %s133, 128, 128, 8
        $region24: #{decoder_stack.1} parent=19 // pred_fallthru
          _
        // Predicated region
        $region25: #{decoder_stack.1} parent=19 // pred_check
          %p151 = pneg %p80
        $region26: #{decoder_stack.1} parent=19 // pred_check_branch
          %153 = sbr.rel (%p151) target = $region28
        $region27: #{decoder_stack.1} parent=19 // pred_region
          %p154 = scmp.lt.s32.totalorder %s13, 1
          %s155 = scalar_select %p154, %s13, 1
          %s156 = smul.addr %s155, 8
          %s157 = scalar_lea.vmem %s2, %s156
        $region28: #{decoder_stack.1} parent=19 // pred_fallthru
          _
      $region20: #{decoder_stack.1} parent=5 // pred_fallthru
        _
      %p158 = scmp.le.s32.totalorder 1, %s13
      %p159 = scmp.lt.s32.totalorder %s13, 3
      %p160 = pnand %p158, %p159
      %p161 = pneg %p160
      // Predicated region
      $region29: #{decoder_stack.1} parent=5 // pred_check
        _
      $region30: #{decoder_stack.1} parent=5 // pred_check_branch
        %163 = sbr.rel (%p160) target = $region32
      $region31: #{decoder_stack.1} parent=5 // pred_region
        %s164 = ssub.s32 %s13, 1
        %s165 = sand.u32 %s47, 1
        %s166 = scalar_lea.sflag [#allocation3], %s165
        %s167 = sand.u32 %s47, 1
        %s168 = smul.addr %s167, 320
        %s169 = scalar_lea.vmem [#allocation2], %s168
        // Predicated region
        $region33: #{decoder_stack.1} parent=31 // pred_check
          %p170 = pneg %p60
        $region34: #{decoder_stack.1} parent=31 // pred_check_branch
          %172 = sbr.rel (%p170) target = $region36
        $region35: #{decoder_stack.1} parent=31 // pred_region
          %174 = dma.done %s166, 5120
        $region36: #{decoder_stack.1} parent=31 // pred_fallthru
          _
        %p175 = pneg %p34
        %p176 = pneg %p31
        %s177 = sand.u32 %s47, 1
        %s178 = scalar_lea.sflag [#allocation3], %s177
        %s179 = sand.u32 %s47, 1
        %s180 = smul.addr %s179, 320
        %s181 = scalar_lea.vmem [#allocation2], %s180
        %p182 = pneg %p60
        %p183 = pneg %p57
        %p184 = scmp.lt.s32.totalorder %s18, 1
        %s185 = scalar_select %p184, %s18, 1
        %s186 = smul.addr %s185, 8
        %s187 = scalar_lea.vmem %s2, %s186
        %p188 = pneg %p86
        %p189 = pneg %p83
        %p190 = pneg %p107
        %p191 = pneg %p104
        %p192 = scmp.lt.s32.totalorder %s18, 1
        %s193 = scalar_select %p192, %s18, 1
        %s194 = smul.addr %s193, 8
        %s195 = scalar_lea.vmem %s2, %s194
        %p196 = scmp.eq.s32.totalorder %s18, 0
        // Predicated region
        $region37: #{decoder_stack.1} parent=31 // pred_check
          %p197 = pneg %p196
        $region38: #{decoder_stack.1} parent=31 // pred_check_branch
          %199 = sbr.rel (%p197) target = $region40
        $region39: #{decoder_stack.1} parent=31 // pred_region
          %v200 = vld [vmem:[%s0] sm:$0xff]
          %v201 = vld [vmem:[%s0 + $0x8] sm:$0xff]
          %vm202 = vcmask 261120
          %203 = vst.msk [vmem:[#allocation5] sm:$0xff] %vm202, %v200
          %204 = vst.msk [vmem:[#allocation5 + $0x8] sm:$0xff] %vm202, %v201
        $region40: #{decoder_stack.1} parent=31 // pred_fallthru
          _
        %v205 = vld [vmem:[#allocation5] sm:$0xff]
        %v206 = vld [vmem:[#allocation5 + $0x8] sm:$0xff]
        %v207 = vld [vmem:[%s0 + $0x10] sm:$0xff]
        %v208 = vld [vmem:[%s0 + $0x18] sm:$0xff]
        %v209 = vld [vmem:[%s0 + $0x20] sm:$0xff]
        %v210 = vld [vmem:[%s0 + $0x28] sm:$0xff]
        %v211 = vld [vmem:[%s195] sm:$0x1]
        %v212 = vld [vmem:[%s195 + $0x1] sm:$0x1]
        %v213 = vld [vmem:[%s195 + $0x2] sm:$0x1]
        %v214 = vld [vmem:[%s195 + $0x3] sm:$0x1]
        %v215 = vld [vmem:[%s195 + $0x4] sm:$0x1]
        %v216 = vld [vmem:[%s195 + $0x5] sm:$0x1]
        %v217 = vld [vmem:[%s195 + $0x6] sm:$0x1]
        %v218 = vld [vmem:[%s195 + $0x7] sm:$0x1]
        %vm219 = vcmask 261120
        %v220 = vsel %vm219, %v205, 0.0
        %221 = vadd.xlane.f32.xlu0 %v220
        %v222 = vpop.xlane.xlu0 %221
        %v223 = vsel %vm219, %v206, 0.0
        %224 = vadd.xlane.f32.xlu0 %v223
        %v225 = vpop.xlane.xlu0 %224
        %v226 = vrcp.pop 32.0
        %v227 = vmul.f32 32.0, %v226
        %v228 = vsub.f32 1.0, %v227
        %v229 = vmul.f32 %v226, %v228
        %v230 = vadd.f32 %v226, %v229
        %vm231 = vweird.f32 %v226
        %v232 = vsel %vm231, %v226, %v230
        %v233 = vmul.f32 %v222, %v232
        %v234 = vmul.f32 %v225, %v232
        %v235 = vsub.f32 %v205, %v233
        %v236 = vsub.f32 %v206, %v234
        %v237 = vmul.f32 %v235, %v235
        %v238 = vmul.f32 %v236, %v236
        %v239 = vsel %vm219, %v237, 0.0
        %240 = vadd.xlane.f32.xlu0 %v239
        %v241 = vpop.xlane.xlu0 %240
        %v242 = vsel %vm219, %v238, 0.0
        %243 = vadd.xlane.f32.xlu0 %v242
        %v244 = vpop.xlane.xlu0 %243
        %v245 = vrcp.pop 31.0
        %v246 = vmul.f32 31.0, %v245
        %v247 = vsub.f32 1.0, %v246
        %v248 = vmul.f32 %v245, %v247
        %v249 = vadd.f32 %v245, %v248
        %vm250 = vweird.f32 %v245
        %v251 = vsel %vm250, %v245, %v249
        %v252 = vmul.f32 %v241, %v251
        %v253 = vmul.f32 %v244, %v251
        %v254 = vrsqrt.pop %v252
        %v255 = vmul.f32 %v254, %v252
        %v256 = vmul.f32 %v255, %v254
        %v257 = vmul.f32 0.5, %v256
        %v258 = vsub.f32 1.5, %v257
        %v259 = vmul.f32 %v254, %v258
        %v260 = vmul.f32 %v252, %v259
        %vm261 = vcmp.eq.f32.partialorder %v252, inf
        %v262 = vsel %vm261, %v252, %v260
        %vm263 = vcmp.eq.f32.partialorder %v252, 0.0
        %v264 = vand.u32 %v252, 2147483648
        %v265 = vsel %vm263, %v264, %v262
        %v266 = vrsqrt.pop %v253
        %v267 = vmul.f32 %v266, %v253
        %v268 = vmul.f32 %v267, %v266
        %v269 = vmul.f32 0.5, %v268
        %v270 = vsub.f32 1.5, %v269
        %v271 = vmul.f32 %v266, %v270
        %v272 = vmul.f32 %v253, %v271
        %vm273 = vcmp.eq.f32.partialorder %v253, inf
        %v274 = vsel %vm273, %v253, %v272
        %vm275 = vcmp.eq.f32.partialorder %v253, 0.0
        %v276 = vand.u32 %v253, 2147483648
        %v277 = vsel %vm275, %v276, %v274
        %v278 = vperm.slane %v211, 0
        %v279 = vmul.f32 %v278, %v235
        %v280 = vmul.f32 %v278, %v236
        %v281 = vadd.f32 %v265, 1e-06
        %v282 = vadd.f32 %v277, 1e-06
        %v283 = vrcp.pop %v281
        %v284 = vmul.f32 %v281, %v283
        %v285 = vsub.f32 1.0, %v284
        %v286 = vmul.f32 %v283, %v285
        %v287 = vadd.f32 %v283, %v286
        %vm288 = vweird.f32 %v281
        %vm289 = vweird.f32 %v283
        %vm290 = vmor %vm288, %vm289
        %v291 = vsel %vm290, %v283, %v287
        %v292 = vand.u32 2147483647, %v281
        %vm293 = vcmp.eq.f32.partialorder %v292, 8.507059e+37
        %v294 = vand.u32 %v281, 2147483648
        %v295 = vor.u32 1.1754944e-38, %v294
        %v296 = vsel %vm293, %v295, %v291
        %v297 = vmul.f32 %v279, %v296
        %v298 = vrcp.pop %v282
        %v299 = vmul.f32 %v282, %v298
        %v300 = vsub.f32 1.0, %v299
        %v301 = vmul.f32 %v298, %v300
        %v302 = vadd.f32 %v298, %v301
        %vm303 = vweird.f32 %v282
        %vm304 = vweird.f32 %v298
        %vm305 = vmor %vm303, %vm304
        %v306 = vsel %vm305, %v298, %v302
        %v307 = vand.u32 2147483647, %v282
        %vm308 = vcmp.eq.f32.partialorder %v307, 8.507059e+37
        %v309 = vand.u32 %v282, 2147483648
        %v310 = vor.u32 1.1754944e-38, %v309
        %v311 = vsel %vm308, %v310, %v306
        %v312 = vmul.f32 %v280, %v311
        %v313 = vperm.slane %v212, 0
        %v314 = vadd.f32 %v297, %v313
        %v315 = vadd.f32 %v312, %v313
        %v316 = vld [vmem:[%s169] sm:$0xff]
        %v317 = vld [vmem:[%s169 + $0x8] sm:$0xff]
        %v318 = vld [vmem:[%s169 + $0x10] sm:$0xff]
        %v319 = vld [vmem:[%s169 + $0x18] sm:$0xff]
        %v321 = vsel %vm219, %v314, 0
        %v324 = vsel %vm219, %v315, 0
        %326 = vmatpush.msra.mxu0 0.0
        %327 = vmatpush.msra.mxu0 0.0
        %328 = vmatpush.msra.mxu0 0.0
        %329 = vmatpush.msra.mxu0 0.0
        %330 = vmatpush.msra.mxu0 0.0
        %331 = vmatpush.msra.mxu0 0.0
        %332 = vmatpush.msra.mxu0 0.0
        %333 = vmatpush.msra.mxu0 0.0
        %334 = vmatpush.msra.mxu0 0.0
        %335 = vmatpush.msra.mxu0 0.0
        %336 = vmatpush.msra.mxu0 0.0
        %337 = vmatpush.msra.mxu0 0.0
        %338 = vmatpush.msra.mxu0 %v319
        %339 = vmatpush.msra.mxu0 %v318
        %340 = vmatpush.msra.mxu0 %v317
        %341 = vmatpush.msra.mxu0 %v316
        %342 = vmatmul.f32.gmra.mxu0 %v321
        %v343 = vpop.f32.mrf.mxu0
        %v344 = vadd.f32 0.0, %v343
        %345 = vmatmul.f32.gmra.mxu0 %v324
        %v346 = vpop.f32.mrf.mxu0
        %v347 = vadd.f32 0.0, %v346
        %348 = vdwg.mxu0
        %v349 = vld [vmem:[%s169 + $0x20] sm:$0xff]
        %v350 = vld [vmem:[%s169 + $0x28] sm:$0xff]
        %v351 = vld [vmem:[%s169 + $0x30] sm:$0xff]
        %v352 = vld [vmem:[%s169 + $0x38] sm:$0xff]
        %355 = vrot.lane.b32.xlu0 %v344, 120
        %v356 = vpop.permute.xlu0 %355
        %357 = vrot.lane.b32.xlu0 %v347, 120
        %v358 = vpop.permute.xlu0 %357
        %359 = vrot.lane.b32.xlu0 %v344, 112
        %v360 = vpop.permute.xlu0 %359
        %361 = vrot.lane.b32.xlu0 %v347, 112
        %v362 = vpop.permute.xlu0 %361
        %363 = vrot.lane.b32.xlu0 %v344, 104
        %v364 = vpop.permute.xlu0 %363
        %365 = vrot.lane.b32.xlu0 %v347, 104
        %v366 = vpop.permute.xlu0 %365
        %367 = vrot.lane.b32.xlu0 %v344, 96
        %v368 = vpop.permute.xlu0 %367
        %vm369 = vcmask 64512
        %v370 = vsel %vm369, %v344, 0
        %v372 = vsel %vm369, %v368, 0
        %374 = vmatpush.xpose.msra.mxu0 0.0
        %375 = vmatpush.xpose.msra.mxu0 0.0
        %376 = vmatpush.xpose.msra.mxu0 0.0
        %377 = vmatpush.xpose.msra.mxu0 0.0
        %378 = vmatpush.xpose.msra.mxu0 0.0
        %379 = vmatpush.xpose.msra.mxu0 0.0
        %380 = vmatpush.xpose.msra.mxu0 0.0
        %381 = vmatpush.xpose.msra.mxu0 0.0
        %382 = vmatpush.xpose.msra.mxu0 0.0
        %383 = vmatpush.xpose.msra.mxu0 0.0
        %384 = vmatpush.xpose.msra.mxu0 0.0
        %385 = vmatpush.xpose.msra.mxu0 0.0
        %386 = vmatpush.xpose.msra.mxu0 0.0
        %387 = vmatpush.xpose.msra.mxu0 0.0
        %388 = vmatpush.xpose.msra.mxu0 0.0
        %389 = vmatpush.xpose.msra.mxu0 %v372
        %390 = vmatmul.f32.gmra.mxu0 %v370
        %v391 = vpop.f32.mrf.mxu0
        %v392 = vadd.f32 %v209, %v391
        %393 = vdwg.mxu0
        %394 = vrot.lane.b32.xlu0 %v347, 96
        %v395 = vpop.permute.xlu0 %394
        %v396 = vsel %vm369, %v347, 0
        %v398 = vsel %vm369, %v395, 0
        %400 = vmatpush.xpose.msra.mxu0 0.0
        %401 = vmatpush.xpose.msra.mxu0 0.0
        %402 = vmatpush.xpose.msra.mxu0 0.0
        %403 = vmatpush.xpose.msra.mxu0 0.0
        %404 = vmatpush.xpose.msra.mxu0 0.0
        %405 = vmatpush.xpose.msra.mxu0 0.0
        %406 = vmatpush.xpose.msra.mxu0 0.0
        %407 = vmatpush.xpose.msra.mxu0 0.0
        %408 = vmatpush.xpose.msra.mxu0 0.0
        %409 = vmatpush.xpose.msra.mxu0 0.0
        %410 = vmatpush.xpose.msra.mxu0 0.0
        %411 = vmatpush.xpose.msra.mxu0 0.0
        %412 = vmatpush.xpose.msra.mxu0 0.0
        %413 = vmatpush.xpose.msra.mxu0 0.0
        %414 = vmatpush.xpose.msra.mxu0 0.0
        %415 = vmatpush.xpose.msra.mxu0 %v398
        %416 = vmatmul.f32.gmra.mxu0 %v396
        %v417 = vpop.f32.mrf.mxu0
        %v418 = vadd.f32 %v209, %v417
        %419 = vdwg.mxu0
        %420 = vrot.lane.b32.xlu0 %v356, 96
        %v421 = vpop.permute.xlu0 %420
        %v422 = vsel %vm369, %v356, 0
        %v424 = vsel %vm369, %v421, 0
        %426 = vmatpush.xpose.msra.mxu0 0.0
        %427 = vmatpush.xpose.msra.mxu0 0.0
        %428 = vmatpush.xpose.msra.mxu0 0.0
        %429 = vmatpush.xpose.msra.mxu0 0.0
        %430 = vmatpush.xpose.msra.mxu0 0.0
        %431 = vmatpush.xpose.msra.mxu0 0.0
        %432 = vmatpush.xpose.msra.mxu0 0.0
        %433 = vmatpush.xpose.msra.mxu0 0.0
        %434 = vmatpush.xpose.msra.mxu0 0.0
        %435 = vmatpush.xpose.msra.mxu0 0.0
        %436 = vmatpush.xpose.msra.mxu0 0.0
        %437 = vmatpush.xpose.msra.mxu0 0.0
        %438 = vmatpush.xpose.msra.mxu0 0.0
        %439 = vmatpush.xpose.msra.mxu0 0.0
        %440 = vmatpush.xpose.msra.mxu0 0.0
        %441 = vmatpush.xpose.msra.mxu0 %v424
        %442 = vmatmul.f32.gmra.mxu0 %v422
        %v443 = vpop.f32.mrf.mxu0
        %v444 = vadd.f32 %v209, %v443
        %445 = vdwg.mxu0
        %446 = vrot.lane.b32.xlu0 %v358, 96
        %v447 = vpop.permute.xlu0 %446
        %v448 = vsel %vm369, %v358, 0
        %v450 = vsel %vm369, %v447, 0
        %452 = vmatpush.xpose.msra.mxu0 0.0
        %453 = vmatpush.xpose.msra.mxu0 0.0
        %454 = vmatpush.xpose.msra.mxu0 0.0
        %455 = vmatpush.xpose.msra.mxu0 0.0
        %456 = vmatpush.xpose.msra.mxu0 0.0
        %457 = vmatpush.xpose.msra.mxu0 0.0
        %458 = vmatpush.xpose.msra.mxu0 0.0
        %459 = vmatpush.xpose.msra.mxu0 0.0
        %460 = vmatpush.xpose.msra.mxu0 0.0
        %461 = vmatpush.xpose.msra.mxu0 0.0
        %462 = vmatpush.xpose.msra.mxu0 0.0
        %463 = vmatpush.xpose.msra.mxu0 0.0
        %464 = vmatpush.xpose.msra.mxu0 0.0
        %465 = vmatpush.xpose.msra.mxu0 0.0
        %466 = vmatpush.xpose.msra.mxu0 0.0
        %467 = vmatpush.xpose.msra.mxu0 %v450
        %468 = vmatmul.f32.gmra.mxu0 %v448
        %v469 = vpop.f32.mrf.mxu0
        %v470 = vadd.f32 %v209, %v469
        %471 = vdwg.mxu0
        %472 = vrot.lane.b32.xlu0 %v360, 96
        %v473 = vpop.permute.xlu0 %472
        %v474 = vsel %vm369, %v360, 0
        %v476 = vsel %vm369, %v473, 0
        %478 = vmatpush.xpose.msra.mxu0 0.0
        %479 = vmatpush.xpose.msra.mxu0 0.0
        %480 = vmatpush.xpose.msra.mxu0 0.0
        %481 = vmatpush.xpose.msra.mxu0 0.0
        %482 = vmatpush.xpose.msra.mxu0 0.0
        %483 = vmatpush.xpose.msra.mxu0 0.0
        %484 = vmatpush.xpose.msra.mxu0 0.0
        %485 = vmatpush.xpose.msra.mxu0 0.0
        %486 = vmatpush.xpose.msra.mxu0 0.0
        %487 = vmatpush.xpose.msra.mxu0 0.0
        %488 = vmatpush.xpose.msra.mxu0 0.0
        %489 = vmatpush.xpose.msra.mxu0 0.0
        %490 = vmatpush.xpose.msra.mxu0 0.0
        %491 = vmatpush.xpose.msra.mxu0 0.0
        %492 = vmatpush.xpose.msra.mxu0 0.0
        %493 = vmatpush.xpose.msra.mxu0 %v476
        %494 = vmatmul.f32.gmra.mxu0 %v474
        %v495 = vpop.f32.mrf.mxu0
        %v496 = vadd.f32 %v209, %v495
        %497 = vdwg.mxu0
        %498 = vrot.lane.b32.xlu0 %v362, 96
        %v499 = vpop.permute.xlu0 %498
        %v500 = vsel %vm369, %v362, 0
        %v502 = vsel %vm369, %v499, 0
        %504 = vmatpush.xpose.msra.mxu0 0.0
        %505 = vmatpush.xpose.msra.mxu0 0.0
        %506 = vmatpush.xpose.msra.mxu0 0.0
        %507 = vmatpush.xpose.msra.mxu0 0.0
        %508 = vmatpush.xpose.msra.mxu0 0.0
        %509 = vmatpush.xpose.msra.mxu0 0.0
        %510 = vmatpush.xpose.msra.mxu0 0.0
        %511 = vmatpush.xpose.msra.mxu0 0.0
        %512 = vmatpush.xpose.msra.mxu0 0.0
        %513 = vmatpush.xpose.msra.mxu0 0.0
        %514 = vmatpush.xpose.msra.mxu0 0.0
        %515 = vmatpush.xpose.msra.mxu0 0.0
        %516 = vmatpush.xpose.msra.mxu0 0.0
        %517 = vmatpush.xpose.msra.mxu0 0.0
        %518 = vmatpush.xpose.msra.mxu0 0.0
        %519 = vmatpush.xpose.msra.mxu0 %v502
        %520 = vmatmul.f32.gmra.mxu0 %v500
        %v521 = vpop.f32.mrf.mxu0
        %v522 = vadd.f32 %v209, %v521
        %523 = vdwg.mxu0
        %524 = vrot.lane.b32.xlu0 %v364, 96
        %v525 = vpop.permute.xlu0 %524
        %v526 = vsel %vm369, %v364, 0
        %v528 = vsel %vm369, %v525, 0
        %530 = vmatpush.xpose.msra.mxu0 0.0
        %531 = vmatpush.xpose.msra.mxu0 0.0
        %532 = vmatpush.xpose.msra.mxu0 0.0
        %533 = vmatpush.xpose.msra.mxu0 0.0
        %534 = vmatpush.xpose.msra.mxu0 0.0
        %535 = vmatpush.xpose.msra.mxu0 0.0
        %536 = vmatpush.xpose.msra.mxu0 0.0
        %537 = vmatpush.xpose.msra.mxu0 0.0
        %538 = vmatpush.xpose.msra.mxu0 0.0
        %539 = vmatpush.xpose.msra.mxu0 0.0
        %540 = vmatpush.xpose.msra.mxu0 0.0
        %541 = vmatpush.xpose.msra.mxu0 0.0
        %542 = vmatpush.xpose.msra.mxu0 0.0
        %543 = vmatpush.xpose.msra.mxu0 0.0
        %544 = vmatpush.xpose.msra.mxu0 0.0
        %545 = vmatpush.xpose.msra.mxu0 %v528
        %546 = vmatmul.f32.gmra.mxu0 %v526
        %v547 = vpop.f32.mrf.mxu0
        %v548 = vadd.f32 %v209, %v547
        %549 = vdwg.mxu0
        %550 = vrot.lane.b32.xlu0 %v366, 96
        %v551 = vpop.permute.xlu0 %550
        %v552 = vsel %vm369, %v366, 0
        %v554 = vsel %vm369, %v551, 0
        %556 = vmatpush.xpose.msra.mxu0 0.0
        %557 = vmatpush.xpose.msra.mxu0 0.0
        %558 = vmatpush.xpose.msra.mxu0 0.0
        %559 = vmatpush.xpose.msra.mxu0 0.0
        %560 = vmatpush.xpose.msra.mxu0 0.0
        %561 = vmatpush.xpose.msra.mxu0 0.0
        %562 = vmatpush.xpose.msra.mxu0 0.0
        %563 = vmatpush.xpose.msra.mxu0 0.0
        %564 = vmatpush.xpose.msra.mxu0 0.0
        %565 = vmatpush.xpose.msra.mxu0 0.0
        %566 = vmatpush.xpose.msra.mxu0 0.0
        %567 = vmatpush.xpose.msra.mxu0 0.0
        %568 = vmatpush.xpose.msra.mxu0 0.0
        %569 = vmatpush.xpose.msra.mxu0 0.0
        %570 = vmatpush.xpose.msra.mxu0 0.0
        %571 = vmatpush.xpose.msra.mxu0 %v554
        %572 = vmatmul.f32.gmra.mxu0 %v552
        %v573 = vpop.f32.mrf.mxu0
        %v574 = vadd.f32 %v209, %v573
        %575 = vdwg.mxu0
        %v576 = vsel %vm369, %v392, -inf
        %577 = vmax.xlane.f32.xlu0 %v576
        %v578 = vpop.xlane.xlu0 %577
        %v579 = vsel %vm369, %v418, -inf
        %580 = vmax.xlane.f32.xlu0 %v579
        %v581 = vpop.xlane.xlu0 %580
        %v582 = vsel %vm369, %v444, -inf
        %583 = vmax.xlane.f32.xlu0 %v582
        %v584 = vpop.xlane.xlu0 %583
        %v585 = vsel %vm369, %v470, -inf
        %586 = vmax.xlane.f32.xlu0 %v585
        %v587 = vpop.xlane.xlu0 %586
        %v588 = vsel %vm369, %v496, -inf
        %589 = vmax.xlane.f32.xlu0 %v588
        %v590 = vpop.xlane.xlu0 %589
        %v591 = vsel %vm369, %v522, -inf
        %592 = vmax.xlane.f32.xlu0 %v591
        %v593 = vpop.xlane.xlu0 %592
        %v594 = vsel %vm369, %v548, -inf
        %595 = vmax.xlane.f32.xlu0 %v594
        %v596 = vpop.xlane.xlu0 %595
        %v597 = vsel %vm369, %v574, -inf
        %598 = vmax.xlane.f32.xlu0 %v597
        %v599 = vpop.xlane.xlu0 %598
        %v600 = vsub.f32 %v392, %v578
        %v601 = vsub.f32 %v418, %v581
        %v602 = vsub.f32 %v444, %v584
        %v603 = vsub.f32 %v470, %v587
        %v604 = vsub.f32 %v496, %v590
        %v605 = vsub.f32 %v522, %v593
        %v606 = vsub.f32 %v548, %v596
        %v607 = vsub.f32 %v574, %v599
        %v608 = vmul.f32 %v600, 1.442695
        %v609 = vpow.pop %v608
        %v610 = vmul.f32 %v601, 1.442695
        %v611 = vpow.pop %v610
        %v612 = vmul.f32 %v602, 1.442695
        %v613 = vpow.pop %v612
        %v614 = vmul.f32 %v603, 1.442695
        %v615 = vpow.pop %v614
        %v616 = vmul.f32 %v604, 1.442695
        %v617 = vpow.pop %v616
        %v618 = vmul.f32 %v605, 1.442695
        %v619 = vpow.pop %v618
        %v620 = vmul.f32 %v606, 1.442695
        %v621 = vpow.pop %v620
        %v622 = vmul.f32 %v607, 1.442695
        %v623 = vpow.pop %v622
        %v624 = vsel %vm369, %v609, 0.0
        %625 = vadd.xlane.f32.xlu0 %v624
        %v626 = vpop.xlane.xlu0 %625
        %v627 = vsel %vm369, %v611, 0.0
        %628 = vadd.xlane.f32.xlu0 %v627
        %v629 = vpop.xlane.xlu0 %628
        %v630 = vsel %vm369, %v613, 0.0
        %631 = vadd.xlane.f32.xlu0 %v630
        %v632 = vpop.xlane.xlu0 %631
        %v633 = vsel %vm369, %v615, 0.0
        %634 = vadd.xlane.f32.xlu0 %v633
        %v635 = vpop.xlane.xlu0 %634
        %v636 = vsel %vm369, %v617, 0.0
        %637 = vadd.xlane.f32.xlu0 %v636
        %v638 = vpop.xlane.xlu0 %637
        %v639 = vsel %vm369, %v619, 0.0
        %640 = vadd.xlane.f32.xlu0 %v639
        %v641 = vpop.xlane.xlu0 %640
        %v642 = vsel %vm369, %v621, 0.0
        %643 = vadd.xlane.f32.xlu0 %v642
        %v644 = vpop.xlane.xlu0 %643
        %v645 = vsel %vm369, %v623, 0.0
        %646 = vadd.xlane.f32.xlu0 %v645
        %v647 = vpop.xlane.xlu0 %646
        %v648 = vrcp.pop %v626
        %v649 = vmul.f32 %v626, %v648
        %v650 = vsub.f32 1.0, %v649
        %v651 = vmul.f32 %v648, %v650
        %v652 = vadd.f32 %v648, %v651
        %vm653 = vweird.f32 %v626
        %vm654 = vweird.f32 %v648
        %vm655 = vmor %vm653, %vm654
        %v656 = vsel %vm655, %v648, %v652
        %v657 = vand.u32 2147483647, %v626
        %vm658 = vcmp.eq.f32.partialorder %v657, 8.507059e+37
        %v659 = vand.u32 %v626, 2147483648
        %v660 = vor.u32 1.1754944e-38, %v659
        %v661 = vsel %vm658, %v660, %v656
        %v662 = vmul.f32 %v609, %v661
        %v663 = vrcp.pop %v629
        %v664 = vmul.f32 %v629, %v663
        %v665 = vsub.f32 1.0, %v664
        %v666 = vmul.f32 %v663, %v665
        %v667 = vadd.f32 %v663, %v666
        %vm668 = vweird.f32 %v629
        %vm669 = vweird.f32 %v663
        %vm670 = vmor %vm668, %vm669
        %v671 = vsel %vm670, %v663, %v667
        %v672 = vand.u32 2147483647, %v629
        %vm673 = vcmp.eq.f32.partialorder %v672, 8.507059e+37
        %v674 = vand.u32 %v629, 2147483648
        %v675 = vor.u32 1.1754944e-38, %v674
        %v676 = vsel %vm673, %v675, %v671
        %v677 = vmul.f32 %v611, %v676
        %v678 = vrcp.pop %v632
        %v679 = vmul.f32 %v632, %v678
        %v680 = vsub.f32 1.0, %v679
        %v681 = vmul.f32 %v678, %v680
        %v682 = vadd.f32 %v678, %v681
        %vm683 = vweird.f32 %v632
        %vm684 = vweird.f32 %v678
        %vm685 = vmor %vm683, %vm684
        %v686 = vsel %vm685, %v678, %v682
        %v687 = vand.u32 2147483647, %v632
        %vm688 = vcmp.eq.f32.partialorder %v687, 8.507059e+37
        %v689 = vand.u32 %v632, 2147483648
        %v690 = vor.u32 1.1754944e-38, %v689
        %v691 = vsel %vm688, %v690, %v686
        %v692 = vmul.f32 %v613, %v691
        %v693 = vrcp.pop %v635
        %v694 = vmul.f32 %v635, %v693
        %v695 = vsub.f32 1.0, %v694
        %v696 = vmul.f32 %v693, %v695
        %v697 = vadd.f32 %v693, %v696
        %vm698 = vweird.f32 %v635
        %vm699 = vweird.f32 %v693
        %vm700 = vmor %vm698, %vm699
        %v701 = vsel %vm700, %v693, %v697
        %v702 = vand.u32 2147483647, %v635
        %vm703 = vcmp.eq.f32.partialorder %v702, 8.507059e+37
        %v704 = vand.u32 %v635, 2147483648
        %v705 = vor.u32 1.1754944e-38, %v704
        %v706 = vsel %vm703, %v705, %v701
        %v707 = vmul.f32 %v615, %v706
        %v708 = vrcp.pop %v638
        %v709 = vmul.f32 %v638, %v708
        %v710 = vsub.f32 1.0, %v709
        %v711 = vmul.f32 %v708, %v710
        %v712 = vadd.f32 %v708, %v711
        %vm713 = vweird.f32 %v638
        %vm714 = vweird.f32 %v708
        %vm715 = vmor %vm713, %vm714
        %v716 = vsel %vm715, %v708, %v712
        %v717 = vand.u32 2147483647, %v638
        %vm718 = vcmp.eq.f32.partialorder %v717, 8.507059e+37
        %v719 = vand.u32 %v638, 2147483648
        %v720 = vor.u32 1.1754944e-38, %v719
        %v721 = vsel %vm718, %v720, %v716
        %v722 = vmul.f32 %v617, %v721
        %v723 = vrcp.pop %v641
        %v724 = vmul.f32 %v641, %v723
        %v725 = vsub.f32 1.0, %v724
        %v726 = vmul.f32 %v723, %v725
        %v727 = vadd.f32 %v723, %v726
        %vm728 = vweird.f32 %v641
        %vm729 = vweird.f32 %v723
        %vm730 = vmor %vm728, %vm729
        %v731 = vsel %vm730, %v723, %v727
        %v732 = vand.u32 2147483647, %v641
        %vm733 = vcmp.eq.f32.partialorder %v732, 8.507059e+37
        %v734 = vand.u32 %v641, 2147483648
        %v735 = vor.u32 1.1754944e-38, %v734
        %v736 = vsel %vm733, %v735, %v731
        %v737 = vmul.f32 %v619, %v736
        %v738 = vrcp.pop %v644
        %v739 = vmul.f32 %v644, %v738
        %v740 = vsub.f32 1.0, %v739
        %v741 = vmul.f32 %v738, %v740
        %v742 = vadd.f32 %v738, %v741
        %vm743 = vweird.f32 %v644
        %vm744 = vweird.f32 %v738
        %vm745 = vmor %vm743, %vm744
        %v746 = vsel %vm745, %v738, %v742
        %v747 = vand.u32 2147483647, %v644
        %vm748 = vcmp.eq.f32.partialorder %v747, 8.507059e+37
        %v749 = vand.u32 %v644, 2147483648
        %v750 = vor.u32 1.1754944e-38, %v749
        %v751 = vsel %vm748, %v750, %v746
        %v752 = vmul.f32 %v621, %v751
        %v753 = vrcp.pop %v647
        %v754 = vmul.f32 %v647, %v753
        %v755 = vsub.f32 1.0, %v754
        %v756 = vmul.f32 %v753, %v755
        %v757 = vadd.f32 %v753, %v756
        %vm758 = vweird.f32 %v647
        %vm759 = vweird.f32 %v753
        %vm760 = vmor %vm758, %vm759
        %v761 = vsel %vm760, %v753, %v757
        %v762 = vand.u32 2147483647, %v647
        %vm763 = vcmp.eq.f32.partialorder %v762, 8.507059e+37
        %v764 = vand.u32 %v647, 2147483648
        %v765 = vor.u32 1.1754944e-38, %v764
        %v766 = vsel %vm763, %v765, %v761
        %v767 = vmul.f32 %v623, %v766
        %768 = vrot.lane.b32.xlu0 %v344, 64
        %v769 = vpop.permute.xlu0 %768
        %v772 = vsel %vm369, %v662, 0
        %774 = vmatpush.msra.mxu0 0.0
        %775 = vmatpush.msra.mxu0 0.0
        %776 = vmatpush.msra.mxu0 0.0
        %777 = vmatpush.msra.mxu0 0.0
        %778 = vmatpush.msra.mxu0 0.0
        %779 = vmatpush.msra.mxu0 0.0
        %780 = vmatpush.msra.mxu0 0.0
        %781 = vmatpush.msra.mxu0 0.0
        %782 = vmatpush.msra.mxu0 0.0
        %783 = vmatpush.msra.mxu0 0.0
        %784 = vmatpush.msra.mxu0 0.0
        %785 = vmatpush.msra.mxu0 0.0
        %786 = vmatpush.msra.mxu0 0.0
        %787 = vmatpush.msra.mxu0 0.0
        %788 = vmatpush.msra.mxu0 0.0
        %789 = vmatpush.msra.mxu0 %v769
        %790 = vmatmul.f32.gmra.mxu0 %v772
        %v791 = vpop.f32.mrf.mxu0
        %v792 = vadd.f32 0.0, %v791
        %793 = vdwg.mxu0
        %794 = vrot.lane.b32.xlu0 %v347, 64
        %v795 = vpop.permute.xlu0 %794
        %v798 = vsel %vm369, %v677, 0
        %800 = vmatpush.msra.mxu0 0.0
        %801 = vmatpush.msra.mxu0 0.0
        %802 = vmatpush.msra.mxu0 0.0
        %803 = vmatpush.msra.mxu0 0.0
        %804 = vmatpush.msra.mxu0 0.0
        %805 = vmatpush.msra.mxu0 0.0
        %806 = vmatpush.msra.mxu0 0.0
        %807 = vmatpush.msra.mxu0 0.0
        %808 = vmatpush.msra.mxu0 0.0
        %809 = vmatpush.msra.mxu0 0.0
        %810 = vmatpush.msra.mxu0 0.0
        %811 = vmatpush.msra.mxu0 0.0
        %812 = vmatpush.msra.mxu0 0.0
        %813 = vmatpush.msra.mxu0 0.0
        %814 = vmatpush.msra.mxu0 0.0
        %815 = vmatpush.msra.mxu0 %v795
        %816 = vmatmul.f32.gmra.mxu0 %v798
        %v817 = vpop.f32.mrf.mxu0
        %v818 = vadd.f32 0.0, %v817
        %819 = vdwg.mxu0
        %820 = vrot.lane.b32.xlu0 %v356, 64
        %v821 = vpop.permute.xlu0 %820
        %v824 = vsel %vm369, %v692, 0
        %826 = vmatpush.msra.mxu0 0.0
        %827 = vmatpush.msra.mxu0 0.0
        %828 = vmatpush.msra.mxu0 0.0
        %829 = vmatpush.msra.mxu0 0.0
        %830 = vmatpush.msra.mxu0 0.0
        %831 = vmatpush.msra.mxu0 0.0
        %832 = vmatpush.msra.mxu0 0.0
        %833 = vmatpush.msra.mxu0 0.0
        %834 = vmatpush.msra.mxu0 0.0
        %835 = vmatpush.msra.mxu0 0.0
        %836 = vmatpush.msra.mxu0 0.0
        %837 = vmatpush.msra.mxu0 0.0
        %838 = vmatpush.msra.mxu0 0.0
        %839 = vmatpush.msra.mxu0 0.0
        %840 = vmatpush.msra.mxu0 0.0
        %841 = vmatpush.msra.mxu0 %v821
        %842 = vmatmul.f32.gmra.mxu0 %v824
        %v843 = vpop.f32.mrf.mxu0
        %v844 = vadd.f32 0.0, %v843
        %845 = vdwg.mxu0
        %846 = vrot.lane.b32.xlu0 %v358, 64
        %v847 = vpop.permute.xlu0 %846
        %v850 = vsel %vm369, %v707, 0
        %852 = vmatpush.msra.mxu0 0.0
        %853 = vmatpush.msra.mxu0 0.0
        %854 = vmatpush.msra.mxu0 0.0
        %855 = vmatpush.msra.mxu0 0.0
        %856 = vmatpush.msra.mxu0 0.0
        %857 = vmatpush.msra.mxu0 0.0
        %858 = vmatpush.msra.mxu0 0.0
        %859 = vmatpush.msra.mxu0 0.0
        %860 = vmatpush.msra.mxu0 0.0
        %861 = vmatpush.msra.mxu0 0.0
        %862 = vmatpush.msra.mxu0 0.0
        %863 = vmatpush.msra.mxu0 0.0
        %864 = vmatpush.msra.mxu0 0.0
        %865 = vmatpush.msra.mxu0 0.0
        %866 = vmatpush.msra.mxu0 0.0
        %867 = vmatpush.msra.mxu0 %v847
        %868 = vmatmul.f32.gmra.mxu0 %v850
        %v869 = vpop.f32.mrf.mxu0
        %v870 = vadd.f32 0.0, %v869
        %871 = vdwg.mxu0
        %872 = vrot.lane.b32.xlu0 %v360, 64
        %v873 = vpop.permute.xlu0 %872
        %v876 = vsel %vm369, %v722, 0
        %878 = vmatpush.msra.mxu0 0.0
        %879 = vmatpush.msra.mxu0 0.0
        %880 = vmatpush.msra.mxu0 0.0
        %881 = vmatpush.msra.mxu0 0.0
        %882 = vmatpush.msra.mxu0 0.0
        %883 = vmatpush.msra.mxu0 0.0
        %884 = vmatpush.msra.mxu0 0.0
        %885 = vmatpush.msra.mxu0 0.0
        %886 = vmatpush.msra.mxu0 0.0
        %887 = vmatpush.msra.mxu0 0.0
        %888 = vmatpush.msra.mxu0 0.0
        %889 = vmatpush.msra.mxu0 0.0
        %890 = vmatpush.msra.mxu0 0.0
        %891 = vmatpush.msra.mxu0 0.0
        %892 = vmatpush.msra.mxu0 0.0
        %893 = vmatpush.msra.mxu0 %v873
        %894 = vmatmul.f32.gmra.mxu0 %v876
        %v895 = vpop.f32.mrf.mxu0
        %v896 = vadd.f32 0.0, %v895
        %897 = vdwg.mxu0
        %898 = vrot.lane.b32.xlu0 %v362, 64
        %v899 = vpop.permute.xlu0 %898
        %v902 = vsel %vm369, %v737, 0
        %904 = vmatpush.msra.mxu0 0.0
        %905 = vmatpush.msra.mxu0 0.0
        %906 = vmatpush.msra.mxu0 0.0
        %907 = vmatpush.msra.mxu0 0.0
        %908 = vmatpush.msra.mxu0 0.0
        %909 = vmatpush.msra.mxu0 0.0
        %910 = vmatpush.msra.mxu0 0.0
        %911 = vmatpush.msra.mxu0 0.0
        %912 = vmatpush.msra.mxu0 0.0
        %913 = vmatpush.msra.mxu0 0.0
        %914 = vmatpush.msra.mxu0 0.0
        %915 = vmatpush.msra.mxu0 0.0
        %916 = vmatpush.msra.mxu0 0.0
        %917 = vmatpush.msra.mxu0 0.0
        %918 = vmatpush.msra.mxu0 0.0
        %919 = vmatpush.msra.mxu0 %v899
        %920 = vmatmul.f32.gmra.mxu0 %v902
        %v921 = vpop.f32.mrf.mxu0
        %v922 = vadd.f32 0.0, %v921
        %923 = vdwg.mxu0
        %924 = vrot.lane.b32.xlu0 %v364, 64
        %v925 = vpop.permute.xlu0 %924
        %v928 = vsel %vm369, %v752, 0
        %930 = vmatpush.msra.mxu0 0.0
        %931 = vmatpush.msra.mxu0 0.0
        %932 = vmatpush.msra.mxu0 0.0
        %933 = vmatpush.msra.mxu0 0.0
        %934 = vmatpush.msra.mxu0 0.0
        %935 = vmatpush.msra.mxu0 0.0
        %936 = vmatpush.msra.mxu0 0.0
        %937 = vmatpush.msra.mxu0 0.0
        %938 = vmatpush.msra.mxu0 0.0
        %939 = vmatpush.msra.mxu0 0.0
        %940 = vmatpush.msra.mxu0 0.0
        %941 = vmatpush.msra.mxu0 0.0
        %942 = vmatpush.msra.mxu0 0.0
        %943 = vmatpush.msra.mxu0 0.0
        %944 = vmatpush.msra.mxu0 0.0
        %945 = vmatpush.msra.mxu0 %v925
        %946 = vmatmul.f32.gmra.mxu0 %v928
        %v947 = vpop.f32.mrf.mxu0
        %v948 = vadd.f32 0.0, %v947
        %949 = vdwg.mxu0
        %950 = vrot.lane.b32.xlu0 %v366, 64
        %v951 = vpop.permute.xlu0 %950
        %v954 = vsel %vm369, %v767, 0
        %956 = vmatpush.msra.mxu0 0.0
        %957 = vmatpush.msra.mxu0 0.0
        %958 = vmatpush.msra.mxu0 0.0
        %959 = vmatpush.msra.mxu0 0.0
        %960 = vmatpush.msra.mxu0 0.0
        %961 = vmatpush.msra.mxu0 0.0
        %962 = vmatpush.msra.mxu0 0.0
        %963 = vmatpush.msra.mxu0 0.0
        %964 = vmatpush.msra.mxu0 0.0
        %965 = vmatpush.msra.mxu0 0.0
        %966 = vmatpush.msra.mxu0 0.0
        %967 = vmatpush.msra.mxu0 0.0
        %968 = vmatpush.msra.mxu0 0.0
        %969 = vmatpush.msra.mxu0 0.0
        %970 = vmatpush.msra.mxu0 0.0
        %971 = vmatpush.msra.mxu0 %v951
        %972 = vmatmul.f32.gmra.mxu0 %v954
        %v973 = vpop.f32.mrf.mxu0
        %v974 = vadd.f32 0.0, %v973
        %975 = vdwg.mxu0
        %978 = vrot.lane.b32.xlu0 %v844, 8
        %v979 = vpop.permute.xlu0 %978
        %980 = vrot.lane.b32.xlu0 %v870, 8
        %v981 = vpop.permute.xlu0 %980
        %986 = vrot.lane.b32.xlu0 %v896, 16
        %v987 = vpop.permute.xlu0 %986
        %988 = vrot.lane.b32.xlu0 %v922, 16
        %v989 = vpop.permute.xlu0 %988
        %994 = vrot.lane.b32.xlu0 %v948, 24
        %v995 = vpop.permute.xlu0 %994
        %996 = vrot.lane.b32.xlu0 %v974, 24
        %v997 = vpop.permute.xlu0 %996
        %v1000 = vsel %vm369, %v792, %v979
        %v1001 = vsel %vm369, %v818, %v981
        %vm1002 = vcmask 130048
        %v1003 = vsel %vm1002, %v1000, %v987
        %v1004 = vsel %vm1002, %v1001, %v989
        %vm1005 = vcmask 195584
        %v1006 = vsel %vm1005, %v1003, %v995
        %v1007 = vsel %vm1005, %v1004, %v997
        %v1009 = vsel %vm219, %v1006, 0
        %v1012 = vsel %vm219, %v1007, 0
        %1014 = vmatpush.msra.mxu0 0.0
        %1015 = vmatpush.msra.mxu0 0.0
        %1016 = vmatpush.msra.mxu0 0.0
        %1017 = vmatpush.msra.mxu0 0.0
        %1018 = vmatpush.msra.mxu0 0.0
        %1019 = vmatpush.msra.mxu0 0.0
        %1020 = vmatpush.msra.mxu0 0.0
        %1021 = vmatpush.msra.mxu0 0.0
        %1022 = vmatpush.msra.mxu0 0.0
        %1023 = vmatpush.msra.mxu0 0.0
        %1024 = vmatpush.msra.mxu0 0.0
        %1025 = vmatpush.msra.mxu0 0.0
        %1026 = vmatpush.msra.mxu0 %v352
        %1027 = vmatpush.msra.mxu0 %v351
        %1028 = vmatpush.msra.mxu0 %v350
        %1029 = vmatpush.msra.mxu0 %v349
        %1030 = vmatmul.f32.gmra.mxu0 %v1009
        %v1031 = vpop.f32.mrf.mxu0
        %v1032 = vadd.f32 0.0, %v1031
        %1033 = vmatmul.f32.gmra.mxu0 %v1012
        %v1034 = vpop.f32.mrf.mxu0
        %v1035 = vadd.f32 0.0, %v1034
        %1036 = vdwg.mxu0
        %v1037 = vadd.f32 %v205, %v1032
        %v1038 = vadd.f32 %v206, %v1035
        %v1039 = vsel %vm219, %v1037, 0.0
        %1040 = vadd.xlane.f32.xlu0 %v1039
        %v1041 = vpop.xlane.xlu0 %1040
        %v1042 = vsel %vm219, %v1038, 0.0
        %1043 = vadd.xlane.f32.xlu0 %v1042
        %v1044 = vpop.xlane.xlu0 %1043
        %v1045 = vmul.f32 %v1041, %v232
        %v1046 = vmul.f32 %v1044, %v232
        %v1047 = vsub.f32 %v1037, %v1045
        %v1048 = vsub.f32 %v1038, %v1046
        %v1049 = vmul.f32 %v1047, %v1047
        %v1050 = vmul.f32 %v1048, %v1048
        %v1051 = vsel %vm219, %v1049, 0.0
        %1052 = vadd.xlane.f32.xlu0 %v1051
        %v1053 = vpop.xlane.xlu0 %1052
        %v1054 = vsel %vm219, %v1050, 0.0
        %1055 = vadd.xlane.f32.xlu0 %v1054
        %v1056 = vpop.xlane.xlu0 %1055
        %v1057 = vmul.f32 %v1053, %v251
        %v1058 = vmul.f32 %v1056, %v251
        %v1059 = vrsqrt.pop %v1057
        %v1060 = vmul.f32 %v1059, %v1057
        %v1061 = vmul.f32 %v1060, %v1059
        %v1062 = vmul.f32 0.5, %v1061
        %v1063 = vsub.f32 1.5, %v1062
        %v1064 = vmul.f32 %v1059, %v1063
        %v1065 = vmul.f32 %v1057, %v1064
        %vm1066 = vcmp.eq.f32.partialorder %v1057, inf
        %v1067 = vsel %vm1066, %v1057, %v1065
        %vm1068 = vcmp.eq.f32.partialorder %v1057, 0.0
        %v1069 = vand.u32 %v1057, 2147483648
        %v1070 = vsel %vm1068, %v1069, %v1067
        %v1071 = vrsqrt.pop %v1058
        %v1072 = vmul.f32 %v1071, %v1058
        %v1073 = vmul.f32 %v1072, %v1071
        %v1074 = vmul.f32 0.5, %v1073
        %v1075 = vsub.f32 1.5, %v1074
        %v1076 = vmul.f32 %v1071, %v1075
        %v1077 = vmul.f32 %v1058, %v1076
        %vm1078 = vcmp.eq.f32.partialorder %v1058, inf
        %v1079 = vsel %vm1078, %v1058, %v1077
        %vm1080 = vcmp.eq.f32.partialorder %v1058, 0.0
        %v1081 = vand.u32 %v1058, 2147483648
        %v1082 = vsel %vm1080, %v1081, %v1079
        %v1083 = vperm.slane %v213, 0
        %v1084 = vmul.f32 %v1083, %v1047
        %v1085 = vmul.f32 %v1083, %v1048
        %v1086 = vadd.f32 %v1070, 1e-06
        %v1087 = vadd.f32 %v1082, 1e-06
        %v1088 = vrcp.pop %v1086
        %v1089 = vmul.f32 %v1086, %v1088
        %v1090 = vsub.f32 1.0, %v1089
        %v1091 = vmul.f32 %v1088, %v1090
        %v1092 = vadd.f32 %v1088, %v1091
        %vm1093 = vweird.f32 %v1086
        %vm1094 = vweird.f32 %v1088
        %vm1095 = vmor %vm1093, %vm1094
        %v1096 = vsel %vm1095, %v1088, %v1092
        %v1097 = vand.u32 2147483647, %v1086
        %vm1098 = vcmp.eq.f32.partialorder %v1097, 8.507059e+37
        %v1099 = vand.u32 %v1086, 2147483648
        %v1100 = vor.u32 1.1754944e-38, %v1099
        %v1101 = vsel %vm1098, %v1100, %v1096
        %v1102 = vmul.f32 %v1084, %v1101
        %v1103 = vrcp.pop %v1087
        %v1104 = vmul.f32 %v1087, %v1103
        %v1105 = vsub.f32 1.0, %v1104
        %v1106 = vmul.f32 %v1103, %v1105
        %v1107 = vadd.f32 %v1103, %v1106
        %vm1108 = vweird.f32 %v1087
        %vm1109 = vweird.f32 %v1103
        %vm1110 = vmor %vm1108, %vm1109
        %v1111 = vsel %vm1110, %v1103, %v1107
        %v1112 = vand.u32 2147483647, %v1087
        %vm1113 = vcmp.eq.f32.partialorder %v1112, 8.507059e+37
        %v1114 = vand.u32 %v1087, 2147483648
        %v1115 = vor.u32 1.1754944e-38, %v1114
        %v1116 = vsel %vm1113, %v1115, %v1111
        %v1117 = vmul.f32 %v1085, %v1116
        %v1118 = vperm.slane %v214, 0
        %v1119 = vadd.f32 %v1102, %v1118
        %v1120 = vadd.f32 %v1117, %v1118
        %v1121 = vld [vmem:[%s169 + $0x40] sm:$0xff]
        %v1122 = vld [vmem:[%s169 + $0x48] sm:$0xff]
        %v1123 = vld [vmem:[%s169 + $0x50] sm:$0xff]
        %v1124 = vld [vmem:[%s169 + $0x58] sm:$0xff]
        %v1126 = vsel %vm219, %v1119, 0
        %v1129 = vsel %vm219, %v1120, 0
        %1131 = vmatpush.msra.mxu0 0.0
        %1132 = vmatpush.msra.mxu0 0.0
        %1133 = vmatpush.msra.mxu0 0.0
        %1134 = vmatpush.msra.mxu0 0.0
        %1135 = vmatpush.msra.mxu0 0.0
        %1136 = vmatpush.msra.mxu0 0.0
        %1137 = vmatpush.msra.mxu0 0.0
        %1138 = vmatpush.msra.mxu0 0.0
        %1139 = vmatpush.msra.mxu0 0.0
        %1140 = vmatpush.msra.mxu0 0.0
        %1141 = vmatpush.msra.mxu0 0.0
        %1142 = vmatpush.msra.mxu0 0.0
        %1143 = vmatpush.msra.mxu0 %v1124
        %1144 = vmatpush.msra.mxu0 %v1123
        %1145 = vmatpush.msra.mxu0 %v1122
        %1146 = vmatpush.msra.mxu0 %v1121
        %1147 = vmatmul.f32.gmra.mxu0 %v1126
        %v1148 = vpop.f32.mrf.mxu0
        %v1149 = vadd.f32 0.0, %v1148
        %1150 = vmatmul.f32.gmra.mxu0 %v1129
        %v1151 = vpop.f32.mrf.mxu0
        %v1152 = vadd.f32 0.0, %v1151
        %1153 = vdwg.mxu0
        %v1154 = vld [vmem:[%s169 + $0x60] sm:$0xff]
        %v1155 = vld [vmem:[%s169 + $0x68] sm:$0xff]
        %v1156 = vld [vmem:[%s169 + $0x70] sm:$0xff]
        %v1157 = vld [vmem:[%s169 + $0x78] sm:$0xff]
        %v1159 = vsel %vm219, %v207, 0
        %v1162 = vsel %vm219, %v208, 0
        %1164 = vmatpush.msra.mxu0 0.0
        %1165 = vmatpush.msra.mxu0 0.0
        %1166 = vmatpush.msra.mxu0 0.0
        %1167 = vmatpush.msra.mxu0 0.0
        %1168 = vmatpush.msra.mxu0 0.0
        %1169 = vmatpush.msra.mxu0 0.0
        %1170 = vmatpush.msra.mxu0 0.0
        %1171 = vmatpush.msra.mxu0 0.0
        %1172 = vmatpush.msra.mxu0 0.0
        %1173 = vmatpush.msra.mxu0 0.0
        %1174 = vmatpush.msra.mxu0 0.0
        %1175 = vmatpush.msra.mxu0 0.0
        %1176 = vmatpush.msra.mxu0 %v1157
        %1177 = vmatpush.msra.mxu0 %v1156
        %1178 = vmatpush.msra.mxu0 %v1155
        %1179 = vmatpush.msra.mxu0 %v1154
        %1180 = vmatmul.f32.gmra.mxu0 %v1159
        %v1181 = vpop.f32.mrf.mxu0
        %v1182 = vadd.f32 0.0, %v1181
        %1183 = vmatmul.f32.gmra.mxu0 %v1162
        %v1184 = vpop.f32.mrf.mxu0
        %v1185 = vadd.f32 0.0, %v1184
        %1186 = vdwg.mxu0
        %v1187 = vld [vmem:[%s169 + $0x80] sm:$0xff]
        %v1188 = vld [vmem:[%s169 + $0x88] sm:$0xff]
        %v1189 = vld [vmem:[%s169 + $0x90] sm:$0xff]
        %v1190 = vld [vmem:[%s169 + $0x98] sm:$0xff]
        %1193 = vrot.lane.b32.xlu0 %v1149, 120
        %v1194 = vpop.permute.xlu0 %1193
        %1195 = vrot.lane.b32.xlu0 %v1152, 120
        %v1196 = vpop.permute.xlu0 %1195
        %1197 = vrot.lane.b32.xlu0 %v1149, 112
        %v1198 = vpop.permute.xlu0 %1197
        %1199 = vrot.lane.b32.xlu0 %v1152, 112
        %v1200 = vpop.permute.xlu0 %1199
        %1201 = vrot.lane.b32.xlu0 %v1149, 104
        %v1202 = vpop.permute.xlu0 %1201
        %1203 = vrot.lane.b32.xlu0 %v1152, 104
        %v1204 = vpop.permute.xlu0 %1203
        %1207 = vrot.lane.b32.xlu0 %v1182, 120
        %v1208 = vpop.permute.xlu0 %1207
        %1209 = vrot.lane.b32.xlu0 %v1185, 120
        %v1210 = vpop.permute.xlu0 %1209
        %1211 = vrot.lane.b32.xlu0 %v1182, 112
        %v1212 = vpop.permute.xlu0 %1211
        %1213 = vrot.lane.b32.xlu0 %v1185, 112
        %v1214 = vpop.permute.xlu0 %1213
        %1215 = vrot.lane.b32.xlu0 %v1182, 104
        %v1216 = vpop.permute.xlu0 %1215
        %1217 = vrot.lane.b32.xlu0 %v1185, 104
        %v1218 = vpop.permute.xlu0 %1217
        %v1219 = vsel %vm369, %v1149, 0
        %v1221 = vsel %vm369, %v1182, 0
        %1223 = vmatpush.xpose.msra.mxu0 0.0
        %1224 = vmatpush.xpose.msra.mxu0 0.0
        %1225 = vmatpush.xpose.msra.mxu0 0.0
        %1226 = vmatpush.xpose.msra.mxu0 0.0
        %1227 = vmatpush.xpose.msra.mxu0 0.0
        %1228 = vmatpush.xpose.msra.mxu0 0.0
        %1229 = vmatpush.xpose.msra.mxu0 0.0
        %1230 = vmatpush.xpose.msra.mxu0 0.0
        %1231 = vmatpush.xpose.msra.mxu0 0.0
        %1232 = vmatpush.xpose.msra.mxu0 0.0
        %1233 = vmatpush.xpose.msra.mxu0 0.0
        %1234 = vmatpush.xpose.msra.mxu0 0.0
        %1235 = vmatpush.xpose.msra.mxu0 0.0
        %1236 = vmatpush.xpose.msra.mxu0 0.0
        %1237 = vmatpush.xpose.msra.mxu0 0.0
        %1238 = vmatpush.xpose.msra.mxu0 %v1221
        %1239 = vmatmul.f32.gmra.mxu0 %v1219
        %v1240 = vpop.f32.mrf.mxu0
        %v1241 = vadd.f32 %v210, %v1240
        %1242 = vdwg.mxu0
        %v1243 = vsel %vm369, %v1152, 0
        %v1245 = vsel %vm369, %v1185, 0
        %1247 = vmatpush.xpose.msra.mxu0 0.0
        %1248 = vmatpush.xpose.msra.mxu0 0.0
        %1249 = vmatpush.xpose.msra.mxu0 0.0
        %1250 = vmatpush.xpose.msra.mxu0 0.0
        %1251 = vmatpush.xpose.msra.mxu0 0.0
        %1252 = vmatpush.xpose.msra.mxu0 0.0
        %1253 = vmatpush.xpose.msra.mxu0 0.0
        %1254 = vmatpush.xpose.msra.mxu0 0.0
        %1255 = vmatpush.xpose.msra.mxu0 0.0
        %1256 = vmatpush.xpose.msra.mxu0 0.0
        %1257 = vmatpush.xpose.msra.mxu0 0.0
        %1258 = vmatpush.xpose.msra.mxu0 0.0
        %1259 = vmatpush.xpose.msra.mxu0 0.0
        %1260 = vmatpush.xpose.msra.mxu0 0.0
        %1261 = vmatpush.xpose.msra.mxu0 0.0
        %1262 = vmatpush.xpose.msra.mxu0 %v1245
        %1263 = vmatmul.f32.gmra.mxu0 %v1243
        %v1264 = vpop.f32.mrf.mxu0
        %v1265 = vadd.f32 %v210, %v1264
        %1266 = vdwg.mxu0
        %v1267 = vsel %vm369, %v1194, 0
        %v1269 = vsel %vm369, %v1208, 0
        %1271 = vmatpush.xpose.msra.mxu0 0.0
        %1272 = vmatpush.xpose.msra.mxu0 0.0
        %1273 = vmatpush.xpose.msra.mxu0 0.0
        %1274 = vmatpush.xpose.msra.mxu0 0.0
        %1275 = vmatpush.xpose.msra.mxu0 0.0
        %1276 = vmatpush.xpose.msra.mxu0 0.0
        %1277 = vmatpush.xpose.msra.mxu0 0.0
        %1278 = vmatpush.xpose.msra.mxu0 0.0
        %1279 = vmatpush.xpose.msra.mxu0 0.0
        %1280 = vmatpush.xpose.msra.mxu0 0.0
        %1281 = vmatpush.xpose.msra.mxu0 0.0
        %1282 = vmatpush.xpose.msra.mxu0 0.0
        %1283 = vmatpush.xpose.msra.mxu0 0.0
        %1284 = vmatpush.xpose.msra.mxu0 0.0
        %1285 = vmatpush.xpose.msra.mxu0 0.0
        %1286 = vmatpush.xpose.msra.mxu0 %v1269
        %1287 = vmatmul.f32.gmra.mxu0 %v1267
        %v1288 = vpop.f32.mrf.mxu0
        %v1289 = vadd.f32 %v210, %v1288
        %1290 = vdwg.mxu0
        %v1291 = vsel %vm369, %v1196, 0
        %v1293 = vsel %vm369, %v1210, 0
        %1295 = vmatpush.xpose.msra.mxu0 0.0
        %1296 = vmatpush.xpose.msra.mxu0 0.0
        %1297 = vmatpush.xpose.msra.mxu0 0.0
        %1298 = vmatpush.xpose.msra.mxu0 0.0
        %1299 = vmatpush.xpose.msra.mxu0 0.0
        %1300 = vmatpush.xpose.msra.mxu0 0.0
        %1301 = vmatpush.xpose.msra.mxu0 0.0
        %1302 = vmatpush.xpose.msra.mxu0 0.0
        %1303 = vmatpush.xpose.msra.mxu0 0.0
        %1304 = vmatpush.xpose.msra.mxu0 0.0
        %1305 = vmatpush.xpose.msra.mxu0 0.0
        %1306 = vmatpush.xpose.msra.mxu0 0.0
        %1307 = vmatpush.xpose.msra.mxu0 0.0
        %1308 = vmatpush.xpose.msra.mxu0 0.0
        %1309 = vmatpush.xpose.msra.mxu0 0.0
        %1310 = vmatpush.xpose.msra.mxu0 %v1293
        %1311 = vmatmul.f32.gmra.mxu0 %v1291
        %v1312 = vpop.f32.mrf.mxu0
        %v1313 = vadd.f32 %v210, %v1312
        %1314 = vdwg.mxu0
        %v1315 = vsel %vm369, %v1198, 0
        %v1317 = vsel %vm369, %v1212, 0
        %1319 = vmatpush.xpose.msra.mxu0 0.0
        %1320 = vmatpush.xpose.msra.mxu0 0.0
        %1321 = vmatpush.xpose.msra.mxu0 0.0
        %1322 = vmatpush.xpose.msra.mxu0 0.0
        %1323 = vmatpush.xpose.msra.mxu0 0.0
        %1324 = vmatpush.xpose.msra.mxu0 0.0
        %1325 = vmatpush.xpose.msra.mxu0 0.0
        %1326 = vmatpush.xpose.msra.mxu0 0.0
        %1327 = vmatpush.xpose.msra.mxu0 0.0
        %1328 = vmatpush.xpose.msra.mxu0 0.0
        %1329 = vmatpush.xpose.msra.mxu0 0.0
        %1330 = vmatpush.xpose.msra.mxu0 0.0
        %1331 = vmatpush.xpose.msra.mxu0 0.0
        %1332 = vmatpush.xpose.msra.mxu0 0.0
        %1333 = vmatpush.xpose.msra.mxu0 0.0
        %1334 = vmatpush.xpose.msra.mxu0 %v1317
        %1335 = vmatmul.f32.gmra.mxu0 %v1315
        %v1336 = vpop.f32.mrf.mxu0
        %v1337 = vadd.f32 %v210, %v1336
        %1338 = vdwg.mxu0
        %v1339 = vsel %vm369, %v1200, 0
        %v1341 = vsel %vm369, %v1214, 0
        %1343 = vmatpush.xpose.msra.mxu0 0.0
        %1344 = vmatpush.xpose.msra.mxu0 0.0
        %1345 = vmatpush.xpose.msra.mxu0 0.0
        %1346 = vmatpush.xpose.msra.mxu0 0.0
        %1347 = vmatpush.xpose.msra.mxu0 0.0
        %1348 = vmatpush.xpose.msra.mxu0 0.0
        %1349 = vmatpush.xpose.msra.mxu0 0.0
        %1350 = vmatpush.xpose.msra.mxu0 0.0
        %1351 = vmatpush.xpose.msra.mxu0 0.0
        %1352 = vmatpush.xpose.msra.mxu0 0.0
        %1353 = vmatpush.xpose.msra.mxu0 0.0
        %1354 = vmatpush.xpose.msra.mxu0 0.0
        %1355 = vmatpush.xpose.msra.mxu0 0.0
        %1356 = vmatpush.xpose.msra.mxu0 0.0
        %1357 = vmatpush.xpose.msra.mxu0 0.0
        %1358 = vmatpush.xpose.msra.mxu0 %v1341
        %1359 = vmatmul.f32.gmra.mxu0 %v1339
        %v1360 = vpop.f32.mrf.mxu0
        %v1361 = vadd.f32 %v210, %v1360
        %1362 = vdwg.mxu0
        %v1363 = vsel %vm369, %v1202, 0
        %v1365 = vsel %vm369, %v1216, 0
        %1367 = vmatpush.xpose.msra.mxu0 0.0
        %1368 = vmatpush.xpose.msra.mxu0 0.0
        %1369 = vmatpush.xpose.msra.mxu0 0.0
        %1370 = vmatpush.xpose.msra.mxu0 0.0
        %1371 = vmatpush.xpose.msra.mxu0 0.0
        %1372 = vmatpush.xpose.msra.mxu0 0.0
        %1373 = vmatpush.xpose.msra.mxu0 0.0
        %1374 = vmatpush.xpose.msra.mxu0 0.0
        %1375 = vmatpush.xpose.msra.mxu0 0.0
        %1376 = vmatpush.xpose.msra.mxu0 0.0
        %1377 = vmatpush.xpose.msra.mxu0 0.0
        %1378 = vmatpush.xpose.msra.mxu0 0.0
        %1379 = vmatpush.xpose.msra.mxu0 0.0
        %1380 = vmatpush.xpose.msra.mxu0 0.0
        %1381 = vmatpush.xpose.msra.mxu0 0.0
        %1382 = vmatpush.xpose.msra.mxu0 %v1365
        %1383 = vmatmul.f32.gmra.mxu0 %v1363
        %v1384 = vpop.f32.mrf.mxu0
        %v1385 = vadd.f32 %v210, %v1384
        %1386 = vdwg.mxu0
        %v1387 = vsel %vm369, %v1204, 0
        %v1389 = vsel %vm369, %v1218, 0
        %1391 = vmatpush.xpose.msra.mxu0 0.0
        %1392 = vmatpush.xpose.msra.mxu0 0.0
        %1393 = vmatpush.xpose.msra.mxu0 0.0
        %1394 = vmatpush.xpose.msra.mxu0 0.0
        %1395 = vmatpush.xpose.msra.mxu0 0.0
        %1396 = vmatpush.xpose.msra.mxu0 0.0
        %1397 = vmatpush.xpose.msra.mxu0 0.0
        %1398 = vmatpush.xpose.msra.mxu0 0.0
        %1399 = vmatpush.xpose.msra.mxu0 0.0
        %1400 = vmatpush.xpose.msra.mxu0 0.0
        %1401 = vmatpush.xpose.msra.mxu0 0.0
        %1402 = vmatpush.xpose.msra.mxu0 0.0
        %1403 = vmatpush.xpose.msra.mxu0 0.0
        %1404 = vmatpush.xpose.msra.mxu0 0.0
        %1405 = vmatpush.xpose.msra.mxu0 0.0
        %1406 = vmatpush.xpose.msra.mxu0 %v1389
        %1407 = vmatmul.f32.gmra.mxu0 %v1387
        %v1408 = vpop.f32.mrf.mxu0
        %v1409 = vadd.f32 %v210, %v1408
        %1410 = vdwg.mxu0
        %v1411 = vsel %vm369, %v1241, -inf
        %1412 = vmax.xlane.f32.xlu0 %v1411
        %v1413 = vpop.xlane.xlu0 %1412
        %v1414 = vsel %vm369, %v1265, -inf
        %1415 = vmax.xlane.f32.xlu0 %v1414
        %v1416 = vpop.xlane.xlu0 %1415
        %v1417 = vsel %vm369, %v1289, -inf
        %1418 = vmax.xlane.f32.xlu0 %v1417
        %v1419 = vpop.xlane.xlu0 %1418
        %v1420 = vsel %vm369, %v1313, -inf
        %1421 = vmax.xlane.f32.xlu0 %v1420
        %v1422 = vpop.xlane.xlu0 %1421
        %v1423 = vsel %vm369, %v1337, -inf
        %1424 = vmax.xlane.f32.xlu0 %v1423
        %v1425 = vpop.xlane.xlu0 %1424
        %v1426 = vsel %vm369, %v1361, -inf
        %1427 = vmax.xlane.f32.xlu0 %v1426
        %v1428 = vpop.xlane.xlu0 %1427
        %v1429 = vsel %vm369, %v1385, -inf
        %1430 = vmax.xlane.f32.xlu0 %v1429
        %v1431 = vpop.xlane.xlu0 %1430
        %v1432 = vsel %vm369, %v1409, -inf
        %1433 = vmax.xlane.f32.xlu0 %v1432
        %v1434 = vpop.xlane.xlu0 %1433
        %v1435 = vsub.f32 %v1241, %v1413
        %v1436 = vsub.f32 %v1265, %v1416
        %v1437 = vsub.f32 %v1289, %v1419
        %v1438 = vsub.f32 %v1313, %v1422
        %v1439 = vsub.f32 %v1337, %v1425
        %v1440 = vsub.f32 %v1361, %v1428
        %v1441 = vsub.f32 %v1385, %v1431
        %v1442 = vsub.f32 %v1409, %v1434
        %v1443 = vmul.f32 %v1435, 1.442695
        %v1444 = vpow.pop %v1443
        %v1445 = vmul.f32 %v1436, 1.442695
        %v1446 = vpow.pop %v1445
        %v1447 = vmul.f32 %v1437, 1.442695
        %v1448 = vpow.pop %v1447
        %v1449 = vmul.f32 %v1438, 1.442695
        %v1450 = vpow.pop %v1449
        %v1451 = vmul.f32 %v1439, 1.442695
        %v1452 = vpow.pop %v1451
        %v1453 = vmul.f32 %v1440, 1.442695
        %v1454 = vpow.pop %v1453
        %v1455 = vmul.f32 %v1441, 1.442695
        %v1456 = vpow.pop %v1455
        %v1457 = vmul.f32 %v1442, 1.442695
        %v1458 = vpow.pop %v1457
        %v1459 = vsel %vm369, %v1444, 0.0
        %1460 = vadd.xlane.f32.xlu0 %v1459
        %v1461 = vpop.xlane.xlu0 %1460
        %v1462 = vsel %vm369, %v1446, 0.0
        %1463 = vadd.xlane.f32.xlu0 %v1462
        %v1464 = vpop.xlane.xlu0 %1463
        %v1465 = vsel %vm369, %v1448, 0.0
        %1466 = vadd.xlane.f32.xlu0 %v1465
        %v1467 = vpop.xlane.xlu0 %1466
        %v1468 = vsel %vm369, %v1450, 0.0
        %1469 = vadd.xlane.f32.xlu0 %v1468
        %v1470 = vpop.xlane.xlu0 %1469
        %v1471 = vsel %vm369, %v1452, 0.0
        %1472 = vadd.xlane.f32.xlu0 %v1471
        %v1473 = vpop.xlane.xlu0 %1472
        %v1474 = vsel %vm369, %v1454, 0.0
        %1475 = vadd.xlane.f32.xlu0 %v1474
        %v1476 = vpop.xlane.xlu0 %1475
        %v1477 = vsel %vm369, %v1456, 0.0
        %1478 = vadd.xlane.f32.xlu0 %v1477
        %v1479 = vpop.xlane.xlu0 %1478
        %v1480 = vsel %vm369, %v1458, 0.0
        %1481 = vadd.xlane.f32.xlu0 %v1480
        %v1482 = vpop.xlane.xlu0 %1481
        %v1483 = vrcp.pop %v1461
        %v1484 = vmul.f32 %v1461, %v1483
        %v1485 = vsub.f32 1.0, %v1484
        %v1486 = vmul.f32 %v1483, %v1485
        %v1487 = vadd.f32 %v1483, %v1486
        %vm1488 = vweird.f32 %v1461
        %vm1489 = vweird.f32 %v1483
        %vm1490 = vmor %vm1488, %vm1489
        %v1491 = vsel %vm1490, %v1483, %v1487
        %v1492 = vand.u32 2147483647, %v1461
        %vm1493 = vcmp.eq.f32.partialorder %v1492, 8.507059e+37
        %v1494 = vand.u32 %v1461, 2147483648
        %v1495 = vor.u32 1.1754944e-38, %v1494
        %v1496 = vsel %vm1493, %v1495, %v1491
        %v1497 = vmul.f32 %v1444, %v1496
        %v1498 = vrcp.pop %v1464
        %v1499 = vmul.f32 %v1464, %v1498
        %v1500 = vsub.f32 1.0, %v1499
        %v1501 = vmul.f32 %v1498, %v1500
        %v1502 = vadd.f32 %v1498, %v1501
        %vm1503 = vweird.f32 %v1464
        %vm1504 = vweird.f32 %v1498
        %vm1505 = vmor %vm1503, %vm1504
        %v1506 = vsel %vm1505, %v1498, %v1502
        %v1507 = vand.u32 2147483647, %v1464
        %vm1508 = vcmp.eq.f32.partialorder %v1507, 8.507059e+37
        %v1509 = vand.u32 %v1464, 2147483648
        %v1510 = vor.u32 1.1754944e-38, %v1509
        %v1511 = vsel %vm1508, %v1510, %v1506
        %v1512 = vmul.f32 %v1446, %v1511
        %v1513 = vrcp.pop %v1467
        %v1514 = vmul.f32 %v1467, %v1513
        %v1515 = vsub.f32 1.0, %v1514
        %v1516 = vmul.f32 %v1513, %v1515
        %v1517 = vadd.f32 %v1513, %v1516
        %vm1518 = vweird.f32 %v1467
        %vm1519 = vweird.f32 %v1513
        %vm1520 = vmor %vm1518, %vm1519
        %v1521 = vsel %vm1520, %v1513, %v1517
        %v1522 = vand.u32 2147483647, %v1467
        %vm1523 = vcmp.eq.f32.partialorder %v1522, 8.507059e+37
        %v1524 = vand.u32 %v1467, 2147483648
        %v1525 = vor.u32 1.1754944e-38, %v1524
        %v1526 = vsel %vm1523, %v1525, %v1521
        %v1527 = vmul.f32 %v1448, %v1526
        %v1528 = vrcp.pop %v1470
        %v1529 = vmul.f32 %v1470, %v1528
        %v1530 = vsub.f32 1.0, %v1529
        %v1531 = vmul.f32 %v1528, %v1530
        %v1532 = vadd.f32 %v1528, %v1531
        %vm1533 = vweird.f32 %v1470
        %vm1534 = vweird.f32 %v1528
        %vm1535 = vmor %vm1533, %vm1534
        %v1536 = vsel %vm1535, %v1528, %v1532
        %v1537 = vand.u32 2147483647, %v1470
        %vm1538 = vcmp.eq.f32.partialorder %v1537, 8.507059e+37
        %v1539 = vand.u32 %v1470, 2147483648
        %v1540 = vor.u32 1.1754944e-38, %v1539
        %v1541 = vsel %vm1538, %v1540, %v1536
        %v1542 = vmul.f32 %v1450, %v1541
        %v1543 = vrcp.pop %v1473
        %v1544 = vmul.f32 %v1473, %v1543
        %v1545 = vsub.f32 1.0, %v1544
        %v1546 = vmul.f32 %v1543, %v1545
        %v1547 = vadd.f32 %v1543, %v1546
        %vm1548 = vweird.f32 %v1473
        %vm1549 = vweird.f32 %v1543
        %vm1550 = vmor %vm1548, %vm1549
        %v1551 = vsel %vm1550, %v1543, %v1547
        %v1552 = vand.u32 2147483647, %v1473
        %vm1553 = vcmp.eq.f32.partialorder %v1552, 8.507059e+37
        %v1554 = vand.u32 %v1473, 2147483648
        %v1555 = vor.u32 1.1754944e-38, %v1554
        %v1556 = vsel %vm1553, %v1555, %v1551
        %v1557 = vmul.f32 %v1452, %v1556
        %v1558 = vrcp.pop %v1476
        %v1559 = vmul.f32 %v1476, %v1558
        %v1560 = vsub.f32 1.0, %v1559
        %v1561 = vmul.f32 %v1558, %v1560
        %v1562 = vadd.f32 %v1558, %v1561
        %vm1563 = vweird.f32 %v1476
        %vm1564 = vweird.f32 %v1558
        %vm1565 = vmor %vm1563, %vm1564
        %v1566 = vsel %vm1565, %v1558, %v1562
        %v1567 = vand.u32 2147483647, %v1476
        %vm1568 = vcmp.eq.f32.partialorder %v1567, 8.507059e+37
        %v1569 = vand.u32 %v1476, 2147483648
        %v1570 = vor.u32 1.1754944e-38, %v1569
        %v1571 = vsel %vm1568, %v1570, %v1566
        %v1572 = vmul.f32 %v1454, %v1571
        %v1573 = vrcp.pop %v1479
        %v1574 = vmul.f32 %v1479, %v1573
        %v1575 = vsub.f32 1.0, %v1574
        %v1576 = vmul.f32 %v1573, %v1575
        %v1577 = vadd.f32 %v1573, %v1576
        %vm1578 = vweird.f32 %v1479
        %vm1579 = vweird.f32 %v1573
        %vm1580 = vmor %vm1578, %vm1579
        %v1581 = vsel %vm1580, %v1573, %v1577
        %v1582 = vand.u32 2147483647, %v1479
        %vm1583 = vcmp.eq.f32.partialorder %v1582, 8.507059e+37
        %v1584 = vand.u32 %v1479, 2147483648
        %v1585 = vor.u32 1.1754944e-38, %v1584
        %v1586 = vsel %vm1583, %v1585, %v1581
        %v1587 = vmul.f32 %v1456, %v1586
        %v1588 = vrcp.pop %v1482
        %v1589 = vmul.f32 %v1482, %v1588
        %v1590 = vsub.f32 1.0, %v1589
        %v1591 = vmul.f32 %v1588, %v1590
        %v1592 = vadd.f32 %v1588, %v1591
        %vm1593 = vweird.f32 %v1482
        %vm1594 = vweird.f32 %v1588
        %vm1595 = vmor %vm1593, %vm1594
        %v1596 = vsel %vm1595, %v1588, %v1592
        %v1597 = vand.u32 2147483647, %v1482
        %vm1598 = vcmp.eq.f32.partialorder %v1597, 8.507059e+37
        %v1599 = vand.u32 %v1482, 2147483648
        %v1600 = vor.u32 1.1754944e-38, %v1599
        %v1601 = vsel %vm1598, %v1600, %v1596
        %v1602 = vmul.f32 %v1458, %v1601
        %1603 = vrot.lane.b32.xlu0 %v1182, 96
        %v1604 = vpop.permute.xlu0 %1603
        %v1607 = vsel %vm369, %v1497, 0
        %1609 = vmatpush.msra.mxu0 0.0
        %1610 = vmatpush.msra.mxu0 0.0
        %1611 = vmatpush.msra.mxu0 0.0
        %1612 = vmatpush.msra.mxu0 0.0
        %1613 = vmatpush.msra.mxu0 0.0
        %1614 = vmatpush.msra.mxu0 0.0
        %1615 = vmatpush.msra.mxu0 0.0
        %1616 = vmatpush.msra.mxu0 0.0
        %1617 = vmatpush.msra.mxu0 0.0
        %1618 = vmatpush.msra.mxu0 0.0
        %1619 = vmatpush.msra.mxu0 0.0
        %1620 = vmatpush.msra.mxu0 0.0
        %1621 = vmatpush.msra.mxu0 0.0
        %1622 = vmatpush.msra.mxu0 0.0
        %1623 = vmatpush.msra.mxu0 0.0
        %1624 = vmatpush.msra.mxu0 %v1604
        %1625 = vmatmul.f32.gmra.mxu0 %v1607
        %v1626 = vpop.f32.mrf.mxu0
        %v1627 = vadd.f32 0.0, %v1626
        %1628 = vdwg.mxu0
        %1629 = vrot.lane.b32.xlu0 %v1185, 96
        %v1630 = vpop.permute.xlu0 %1629
        %v1633 = vsel %vm369, %v1512, 0
        %1635 = vmatpush.msra.mxu0 0.0
        %1636 = vmatpush.msra.mxu0 0.0
        %1637 = vmatpush.msra.mxu0 0.0
        %1638 = vmatpush.msra.mxu0 0.0
        %1639 = vmatpush.msra.mxu0 0.0
        %1640 = vmatpush.msra.mxu0 0.0
        %1641 = vmatpush.msra.mxu0 0.0
        %1642 = vmatpush.msra.mxu0 0.0
        %1643 = vmatpush.msra.mxu0 0.0
        %1644 = vmatpush.msra.mxu0 0.0
        %1645 = vmatpush.msra.mxu0 0.0
        %1646 = vmatpush.msra.mxu0 0.0
        %1647 = vmatpush.msra.mxu0 0.0
        %1648 = vmatpush.msra.mxu0 0.0
        %1649 = vmatpush.msra.mxu0 0.0
        %1650 = vmatpush.msra.mxu0 %v1630
        %1651 = vmatmul.f32.gmra.mxu0 %v1633
        %v1652 = vpop.f32.mrf.mxu0
        %v1653 = vadd.f32 0.0, %v1652
        %1654 = vdwg.mxu0
        %1655 = vrot.lane.b32.xlu0 %v1208, 96
        %v1656 = vpop.permute.xlu0 %1655
        %v1659 = vsel %vm369, %v1527, 0
        %1661 = vmatpush.msra.mxu0 0.0
        %1662 = vmatpush.msra.mxu0 0.0
        %1663 = vmatpush.msra.mxu0 0.0
        %1664 = vmatpush.msra.mxu0 0.0
        %1665 = vmatpush.msra.mxu0 0.0
        %1666 = vmatpush.msra.mxu0 0.0
        %1667 = vmatpush.msra.mxu0 0.0
        %1668 = vmatpush.msra.mxu0 0.0
        %1669 = vmatpush.msra.mxu0 0.0
        %1670 = vmatpush.msra.mxu0 0.0
        %1671 = vmatpush.msra.mxu0 0.0
        %1672 = vmatpush.msra.mxu0 0.0
        %1673 = vmatpush.msra.mxu0 0.0
        %1674 = vmatpush.msra.mxu0 0.0
        %1675 = vmatpush.msra.mxu0 0.0
        %1676 = vmatpush.msra.mxu0 %v1656
        %1677 = vmatmul.f32.gmra.mxu0 %v1659
        %v1678 = vpop.f32.mrf.mxu0
        %v1679 = vadd.f32 0.0, %v1678
        %1680 = vdwg.mxu0
        %1681 = vrot.lane.b32.xlu0 %v1210, 96
        %v1682 = vpop.permute.xlu0 %1681
        %v1685 = vsel %vm369, %v1542, 0
        %1687 = vmatpush.msra.mxu0 0.0
        %1688 = vmatpush.msra.mxu0 0.0
        %1689 = vmatpush.msra.mxu0 0.0
        %1690 = vmatpush.msra.mxu0 0.0
        %1691 = vmatpush.msra.mxu0 0.0
        %1692 = vmatpush.msra.mxu0 0.0
        %1693 = vmatpush.msra.mxu0 0.0
        %1694 = vmatpush.msra.mxu0 0.0
        %1695 = vmatpush.msra.mxu0 0.0
        %1696 = vmatpush.msra.mxu0 0.0
        %1697 = vmatpush.msra.mxu0 0.0
        %1698 = vmatpush.msra.mxu0 0.0
        %1699 = vmatpush.msra.mxu0 0.0
        %1700 = vmatpush.msra.mxu0 0.0
        %1701 = vmatpush.msra.mxu0 0.0
        %1702 = vmatpush.msra.mxu0 %v1682
        %1703 = vmatmul.f32.gmra.mxu0 %v1685
        %v1704 = vpop.f32.mrf.mxu0
        %v1705 = vadd.f32 0.0, %v1704
        %1706 = vdwg.mxu0
        %1707 = vrot.lane.b32.xlu0 %v1212, 96
        %v1708 = vpop.permute.xlu0 %1707
        %v1711 = vsel %vm369, %v1557, 0
        %1713 = vmatpush.msra.mxu0 0.0
        %1714 = vmatpush.msra.mxu0 0.0
        %1715 = vmatpush.msra.mxu0 0.0
        %1716 = vmatpush.msra.mxu0 0.0
        %1717 = vmatpush.msra.mxu0 0.0
        %1718 = vmatpush.msra.mxu0 0.0
        %1719 = vmatpush.msra.mxu0 0.0
        %1720 = vmatpush.msra.mxu0 0.0
        %1721 = vmatpush.msra.mxu0 0.0
        %1722 = vmatpush.msra.mxu0 0.0
        %1723 = vmatpush.msra.mxu0 0.0
        %1724 = vmatpush.msra.mxu0 0.0
        %1725 = vmatpush.msra.mxu0 0.0
        %1726 = vmatpush.msra.mxu0 0.0
        %1727 = vmatpush.msra.mxu0 0.0
        %1728 = vmatpush.msra.mxu0 %v1708
        %1729 = vmatmul.f32.gmra.mxu0 %v1711
        %v1730 = vpop.f32.mrf.mxu0
        %v1731 = vadd.f32 0.0, %v1730
        %1732 = vdwg.mxu0
        %1733 = vrot.lane.b32.xlu0 %v1214, 96
        %v1734 = vpop.permute.xlu0 %1733
        %v1737 = vsel %vm369, %v1572, 0
        %1739 = vmatpush.msra.mxu0 0.0
        %1740 = vmatpush.msra.mxu0 0.0
        %1741 = vmatpush.msra.mxu0 0.0
        %1742 = vmatpush.msra.mxu0 0.0
        %1743 = vmatpush.msra.mxu0 0.0
        %1744 = vmatpush.msra.mxu0 0.0
        %1745 = vmatpush.msra.mxu0 0.0
        %1746 = vmatpush.msra.mxu0 0.0
        %1747 = vmatpush.msra.mxu0 0.0
        %1748 = vmatpush.msra.mxu0 0.0
        %1749 = vmatpush.msra.mxu0 0.0
        %1750 = vmatpush.msra.mxu0 0.0
        %1751 = vmatpush.msra.mxu0 0.0
        %1752 = vmatpush.msra.mxu0 0.0
        %1753 = vmatpush.msra.mxu0 0.0
        %1754 = vmatpush.msra.mxu0 %v1734
        %1755 = vmatmul.f32.gmra.mxu0 %v1737
        %v1756 = vpop.f32.mrf.mxu0
        %v1757 = vadd.f32 0.0, %v1756
        %1758 = vdwg.mxu0
        %1759 = vrot.lane.b32.xlu0 %v1216, 96
        %v1760 = vpop.permute.xlu0 %1759
        %v1763 = vsel %vm369, %v1587, 0
        %1765 = vmatpush.msra.mxu0 0.0
        %1766 = vmatpush.msra.mxu0 0.0
        %1767 = vmatpush.msra.mxu0 0.0
        %1768 = vmatpush.msra.mxu0 0.0
        %1769 = vmatpush.msra.mxu0 0.0
        %1770 = vmatpush.msra.mxu0 0.0
        %1771 = vmatpush.msra.mxu0 0.0
        %1772 = vmatpush.msra.mxu0 0.0
        %1773 = vmatpush.msra.mxu0 0.0
        %1774 = vmatpush.msra.mxu0 0.0
        %1775 = vmatpush.msra.mxu0 0.0
        %1776 = vmatpush.msra.mxu0 0.0
        %1777 = vmatpush.msra.mxu0 0.0
        %1778 = vmatpush.msra.mxu0 0.0
        %1779 = vmatpush.msra.mxu0 0.0
        %1780 = vmatpush.msra.mxu0 %v1760
        %1781 = vmatmul.f32.gmra.mxu0 %v1763
        %v1782 = vpop.f32.mrf.mxu0
        %v1783 = vadd.f32 0.0, %v1782
        %1784 = vdwg.mxu0
        %1785 = vrot.lane.b32.xlu0 %v1218, 96
        %v1786 = vpop.permute.xlu0 %1785
        %v1789 = vsel %vm369, %v1602, 0
        %1791 = vmatpush.msra.mxu0 0.0
        %1792 = vmatpush.msra.mxu0 0.0
        %1793 = vmatpush.msra.mxu0 0.0
        %1794 = vmatpush.msra.mxu0 0.0
        %1795 = vmatpush.msra.mxu0 0.0
        %1796 = vmatpush.msra.mxu0 0.0
        %1797 = vmatpush.msra.mxu0 0.0
        %1798 = vmatpush.msra.mxu0 0.0
        %1799 = vmatpush.msra.mxu0 0.0
        %1800 = vmatpush.msra.mxu0 0.0
        %1801 = vmatpush.msra.mxu0 0.0
        %1802 = vmatpush.msra.mxu0 0.0
        %1803 = vmatpush.msra.mxu0 0.0
        %1804 = vmatpush.msra.mxu0 0.0
        %1805 = vmatpush.msra.mxu0 0.0
        %1806 = vmatpush.msra.mxu0 %v1786
        %1807 = vmatmul.f32.gmra.mxu0 %v1789
        %v1808 = vpop.f32.mrf.mxu0
        %v1809 = vadd.f32 0.0, %v1808
        %1810 = vdwg.mxu0
        %1813 = vrot.lane.b32.xlu0 %v1679, 8
        %v1814 = vpop.permute.xlu0 %1813
        %1815 = vrot.lane.b32.xlu0 %v1705, 8
        %v1816 = vpop.permute.xlu0 %1815
        %1821 = vrot.lane.b32.xlu0 %v1731, 16
        %v1822 = vpop.permute.xlu0 %1821
        %1823 = vrot.lane.b32.xlu0 %v1757, 16
        %v1824 = vpop.permute.xlu0 %1823
        %1829 = vrot.lane.b32.xlu0 %v1783, 24
        %v1830 = vpop.permute.xlu0 %1829
        %1831 = vrot.lane.b32.xlu0 %v1809, 24
        %v1832 = vpop.permute.xlu0 %1831
        %v1835 = vsel %vm369, %v1627, %v1814
        %v1836 = vsel %vm369, %v1653, %v1816
        %v1837 = vsel %vm1002, %v1835, %v1822
        %v1838 = vsel %vm1002, %v1836, %v1824
        %v1839 = vsel %vm1005, %v1837, %v1830
        %v1840 = vsel %vm1005, %v1838, %v1832
        %v1842 = vsel %vm219, %v1839, 0
        %v1845 = vsel %vm219, %v1840, 0
        %1847 = vmatpush.msra.mxu0 0.0
        %1848 = vmatpush.msra.mxu0 0.0
        %1849 = vmatpush.msra.mxu0 0.0
        %1850 = vmatpush.msra.mxu0 0.0
        %1851 = vmatpush.msra.mxu0 0.0
        %1852 = vmatpush.msra.mxu0 0.0
        %1853 = vmatpush.msra.mxu0 0.0
        %1854 = vmatpush.msra.mxu0 0.0
        %1855 = vmatpush.msra.mxu0 0.0
        %1856 = vmatpush.msra.mxu0 0.0
        %1857 = vmatpush.msra.mxu0 0.0
        %1858 = vmatpush.msra.mxu0 0.0
        %1859 = vmatpush.msra.mxu0 %v1190
        %1860 = vmatpush.msra.mxu0 %v1189
        %1861 = vmatpush.msra.mxu0 %v1188
        %1862 = vmatpush.msra.mxu0 %v1187
        %1863 = vmatmul.f32.gmra.mxu0 %v1842
        %v1864 = vpop.f32.mrf.mxu0
        %v1865 = vadd.f32 0.0, %v1864
        %1866 = vmatmul.f32.gmra.mxu0 %v1845
        %v1867 = vpop.f32.mrf.mxu0
        %v1868 = vadd.f32 0.0, %v1867
        %1869 = vdwg.mxu0
        %v1870 = vadd.f32 %v1037, %v1865
        %v1871 = vadd.f32 %v1038, %v1868
        %v1872 = vsel %vm219, %v1870, 0.0
        %1873 = vadd.xlane.f32.xlu0 %v1872
        %v1874 = vpop.xlane.xlu0 %1873
        %v1875 = vsel %vm219, %v1871, 0.0
        %1876 = vadd.xlane.f32.xlu0 %v1875
        %v1877 = vpop.xlane.xlu0 %1876
        %v1878 = vmul.f32 %v1874, %v232
        %v1879 = vmul.f32 %v1877, %v232
        %v1880 = vsub.f32 %v1870, %v1878
        %v1881 = vsub.f32 %v1871, %v1879
        %v1882 = vmul.f32 %v1880, %v1880
        %v1883 = vmul.f32 %v1881, %v1881
        %v1884 = vsel %vm219, %v1882, 0.0
        %1885 = vadd.xlane.f32.xlu0 %v1884
        %v1886 = vpop.xlane.xlu0 %1885
        %v1887 = vsel %vm219, %v1883, 0.0
        %1888 = vadd.xlane.f32.xlu0 %v1887
        %v1889 = vpop.xlane.xlu0 %1888
        %v1890 = vmul.f32 %v1886, %v251
        %v1891 = vmul.f32 %v1889, %v251
        %v1892 = vrsqrt.pop %v1890
        %v1893 = vmul.f32 %v1892, %v1890
        %v1894 = vmul.f32 %v1893, %v1892
        %v1895 = vmul.f32 0.5, %v1894
        %v1896 = vsub.f32 1.5, %v1895
        %v1897 = vmul.f32 %v1892, %v1896
        %v1898 = vmul.f32 %v1890, %v1897
        %vm1899 = vcmp.eq.f32.partialorder %v1890, inf
        %v1900 = vsel %vm1899, %v1890, %v1898
        %vm1901 = vcmp.eq.f32.partialorder %v1890, 0.0
        %v1902 = vand.u32 %v1890, 2147483648
        %v1903 = vsel %vm1901, %v1902, %v1900
        %v1904 = vrsqrt.pop %v1891
        %v1905 = vmul.f32 %v1904, %v1891
        %v1906 = vmul.f32 %v1905, %v1904
        %v1907 = vmul.f32 0.5, %v1906
        %v1908 = vsub.f32 1.5, %v1907
        %v1909 = vmul.f32 %v1904, %v1908
        %v1910 = vmul.f32 %v1891, %v1909
        %vm1911 = vcmp.eq.f32.partialorder %v1891, inf
        %v1912 = vsel %vm1911, %v1891, %v1910
        %vm1913 = vcmp.eq.f32.partialorder %v1891, 0.0
        %v1914 = vand.u32 %v1891, 2147483648
        %v1915 = vsel %vm1913, %v1914, %v1912
        %v1916 = vperm.slane %v215, 0
        %v1917 = vmul.f32 %v1916, %v1880
        %v1918 = vmul.f32 %v1916, %v1881
        %v1919 = vadd.f32 %v1903, 1e-06
        %v1920 = vadd.f32 %v1915, 1e-06
        %v1921 = vrcp.pop %v1919
        %v1922 = vmul.f32 %v1919, %v1921
        %v1923 = vsub.f32 1.0, %v1922
        %v1924 = vmul.f32 %v1921, %v1923
        %v1925 = vadd.f32 %v1921, %v1924
        %vm1926 = vweird.f32 %v1919
        %vm1927 = vweird.f32 %v1921
        %vm1928 = vmor %vm1926, %vm1927
        %v1929 = vsel %vm1928, %v1921, %v1925
        %v1930 = vand.u32 2147483647, %v1919
        %vm1931 = vcmp.eq.f32.partialorder %v1930, 8.507059e+37
        %v1932 = vand.u32 %v1919, 2147483648
        %v1933 = vor.u32 1.1754944e-38, %v1932
        %v1934 = vsel %vm1931, %v1933, %v1929
        %v1935 = vmul.f32 %v1917, %v1934
        %v1936 = vrcp.pop %v1920
        %v1937 = vmul.f32 %v1920, %v1936
        %v1938 = vsub.f32 1.0, %v1937
        %v1939 = vmul.f32 %v1936, %v1938
        %v1940 = vadd.f32 %v1936, %v1939
        %vm1941 = vweird.f32 %v1920
        %vm1942 = vweird.f32 %v1936
        %vm1943 = vmor %vm1941, %vm1942
        %v1944 = vsel %vm1943, %v1936, %v1940
        %v1945 = vand.u32 2147483647, %v1920
        %vm1946 = vcmp.eq.f32.partialorder %v1945, 8.507059e+37
        %v1947 = vand.u32 %v1920, 2147483648
        %v1948 = vor.u32 1.1754944e-38, %v1947
        %v1949 = vsel %vm1946, %v1948, %v1944
        %v1950 = vmul.f32 %v1918, %v1949
        %v1951 = vperm.slane %v216, 0
        %v1952 = vadd.f32 %v1935, %v1951
        %v1953 = vadd.f32 %v1950, %v1951
        %v1954 = vld [vmem:[%s169 + $0xa0] sm:$0xff]
        %v1955 = vld [vmem:[%s169 + $0xa8] sm:$0xff]
        %v1956 = vld [vmem:[%s169 + $0xb0] sm:$0xff]
        %v1957 = vld [vmem:[%s169 + $0xb8] sm:$0xff]
        %v1958 = vperm.slane %v217, 0
        %v1960 = vsel %vm219, %v1952, 0
        %v1963 = vsel %vm219, %v1953, 0
        %1965 = vmatpush.msra.mxu0 0.0
        %1966 = vmatpush.msra.mxu0 0.0
        %1967 = vmatpush.msra.mxu0 0.0
        %1968 = vmatpush.msra.mxu0 0.0
        %1969 = vmatpush.msra.mxu0 0.0
        %1970 = vmatpush.msra.mxu0 0.0
        %1971 = vmatpush.msra.mxu0 0.0
        %1972 = vmatpush.msra.mxu0 0.0
        %1973 = vmatpush.msra.mxu0 0.0
        %1974 = vmatpush.msra.mxu0 0.0
        %1975 = vmatpush.msra.mxu0 0.0
        %1976 = vmatpush.msra.mxu0 0.0
        %1977 = vmatpush.msra.mxu0 %v1957
        %1978 = vmatpush.msra.mxu0 %v1956
        %1979 = vmatpush.msra.mxu0 %v1955
        %1980 = vmatpush.msra.mxu0 %v1954
        %1981 = vmatmul.f32.gmra.mxu0 %v1960
        %v1982 = vpop.f32.mrf.mxu0
        %v1983 = vadd.f32 %v1958, %v1982
        %1984 = vmatmul.f32.gmra.mxu0 %v1963
        %v1985 = vpop.f32.mrf.mxu0
        %v1986 = vadd.f32 %v1958, %v1985
        %1987 = vdwg.mxu0
        %v1988 = vmax.f32 %v1983, 0.0
        %v1989 = vmax.f32 %v1986, 0.0
        %v1990 = vld [vmem:[%s169 + $0xc0] sm:$0xff]
        %v1991 = vld [vmem:[%s169 + $0xc8] sm:$0xff]
        %v1992 = vld [vmem:[%s169 + $0xd0] sm:$0xff]
        %v1993 = vld [vmem:[%s169 + $0xd8] sm:$0xff]
        %v1994 = vld [vmem:[%s169 + $0xe0] sm:$0xff]
        %v1995 = vld [vmem:[%s169 + $0xe8] sm:$0xff]
        %v1996 = vld [vmem:[%s169 + $0xf0] sm:$0xff]
        %v1997 = vld [vmem:[%s169 + $0xf8] sm:$0xff]
        %v1998 = vld [vmem:[%s169 + $0x100] sm:$0xff]
        %v1999 = vld [vmem:[%s169 + $0x108] sm:$0xff]
        %v2000 = vld [vmem:[%s169 + $0x110] sm:$0xff]
        %v2001 = vld [vmem:[%s169 + $0x118] sm:$0xff]
        %v2002 = vld [vmem:[%s169 + $0x120] sm:$0xff]
        %v2003 = vld [vmem:[%s169 + $0x128] sm:$0xff]
        %v2004 = vld [vmem:[%s169 + $0x130] sm:$0xff]
        %v2005 = vld [vmem:[%s169 + $0x138] sm:$0xff]
        %2006 = vmatpush.msra.mxu0 %v2005
        %2007 = vmatpush.msra.mxu0 %v2004
        %2008 = vmatpush.msra.mxu0 %v2003
        %2009 = vmatpush.msra.mxu0 %v2002
        %2010 = vmatpush.msra.mxu0 %v2001
        %2011 = vmatpush.msra.mxu0 %v2000
        %2012 = vmatpush.msra.mxu0 %v1999
        %2013 = vmatpush.msra.mxu0 %v1998
        %2014 = vmatpush.msra.mxu0 %v1997
        %2015 = vmatpush.msra.mxu0 %v1996
        %2016 = vmatpush.msra.mxu0 %v1995
        %2017 = vmatpush.msra.mxu0 %v1994
        %2018 = vmatpush.msra.mxu0 %v1993
        %2019 = vmatpush.msra.mxu0 %v1992
        %2020 = vmatpush.msra.mxu0 %v1991
        %2021 = vmatpush.msra.mxu0 %v1990
        %2022 = vmatmul.f32.gmra.mxu0 %v1988
        %v2023 = vpop.f32.mrf.mxu0
        %v2024 = vadd.f32 0.0, %v2023
        %2025 = vmatmul.f32.gmra.mxu0 %v1989
        %v2026 = vpop.f32.mrf.mxu0
        %v2027 = vadd.f32 0.0, %v2026
        %2028 = vdwg.mxu0
        %v2029 = vadd.f32 %v1870, %v2024
        %v2030 = vadd.f32 %v1871, %v2027
        %v2031 = vperm.slane %v218, 0
        %v2032 = vadd.f32 %v2029, %v2031
        %v2033 = vadd.f32 %v2030, %v2031
        %2034 = vst.msk [vmem:[#allocation5] sm:$0xff] %vm219, %v2032
        %2035 = vst.msk [vmem:[#allocation5 + $0x8] sm:$0xff] %vm219, %v2033
        // Predicated region
        $region41: #{decoder_stack.1} parent=31 // pred_check
          %p2036 = pneg %p104
        $region42: #{decoder_stack.1} parent=31 // pred_check_branch
          %2038 = sbr.rel (%p2036) target = $region44
        $region43: #{decoder_stack.1} parent=31 // pred_region
          %2040 = vsyncadd [#allocation4], 0
          %s2041 = sshll.u32 [#allocation5], 4
          %s2042 = int_to_ptr.vmem [resolvable:$true] %s2041
          %s2043 = sshll.u32 %s3, 4
          %s2044 = int_to_ptr.hbm [resolvable:$true] %s2043
          %2049 = dma.vmem_to_hbm [thread:$0]  %s2042, 256, %s2044, [#allocation4], 128, 128, 8
        $region44: #{decoder_stack.1} parent=31 // pred_fallthru
          _
        // Predicated region
        $region45: #{decoder_stack.1} parent=31 // pred_check
          %p2050 = pneg %p104
        $region46: #{decoder_stack.1} parent=31 // pred_check_branch
          %2052 = sbr.rel (%p2050) target = $region48
        $region47: #{decoder_stack.1} parent=31 // pred_region
          %2054 = dma.done [#allocation4], 256
        $region48: #{decoder_stack.1} parent=31 // pred_fallthru
          _
      $region32: #{decoder_stack.1} parent=5 // pred_fallthru
        _
      %p2055 = scmp.le.s32.totalorder 2, %s13
      // Predicated region
      $region49: #{decoder_stack.1} parent=5 // pred_check
        %p2056 = pneg %p2055
      $region50: #{decoder_stack.1} parent=5 // pred_check_branch
        %2058 = sbr.rel (%p2056) target = $region52
      $region51: #{decoder_stack.1} parent=5 // pred_region
        %s2059 = ssub.s32 %s13, 2
      $region52: #{decoder_stack.1} parent=5 // pred_fallthru
        _
    $region6: #{decoder_stack.1} parent=1 // loop_footer
      %s17 = sadd.s32 1, %s13
    $region7: #{decoder_stack.1} parent=1 // loop_footer_branch
      %12 = sbr.rel target = $region3
    $region8: #{decoder_stack.1} parent=1 // loop_exit
      _
    %2060 = vsyncpa [#allocation3], 1
    %s2061 = scalar_lea.sflag [#allocation3], 1
    %2062 = vsyncpa %s2061, 1
    %2063 = vsyncpa [#allocation4], 1
    %s2064 = scalar_lea.sflag [#allocation4], 1
    %2065 = vsyncpa %s2064, 1

</llo_original>
